<compile_context>
chip_gen: v6e
topology: v6e:2x2x1
jax: 0.10.0
libtpu: 0.0.40
codegen_flags: <defaults>
</compile_context>

<pallas_src>
import functools

import jax
import jax.numpy as jnp
from jax.experimental import pallas as pl
from jax.experimental.pallas import tpu as pltpu


def _round_up(x, m):
    return (x + m - 1) // m * m


def _cdiv(a, b):
    return -(-a // b)


# ----------------------------------------------------------------------------
# Kernel 1: fused  out = relu(X @ W + b)  (BN folded into W, b), bf16 output.
# ----------------------------------------------------------------------------
def _gemm_bias_relu_kernel(x_ref, w_ref, b_ref, o_ref):
    y = jnp.dot(x_ref[...], w_ref[...], preferred_element_type=jnp.float32)  # MXU, f32 acc
    o_ref[...] = jnp.maximum(y + b_ref[...], 0.0).astype(o_ref.dtype)        # bf16 store


# ----------------------------------------------------------------------------
# Kernel 2: fused conv3 + head.
#   y3  = relu(X3 @ W3 + b3)                  (layer3; stays in VMEM/registers)
#   out = sum_p y3[group p] @ Wh[p] + bh      (head; NHWC flatten realized via
#                                              the (p, b) row grouping of X3)
# X3 rows are ordered (p, b) with each kernel-position group padded to Mb rows,
# so each group is a contiguous static slice — no gathers, no in-kernel reshape.
# ----------------------------------------------------------------------------
def _conv3_head_kernel(x_ref, w3_ref, b3_ref, wh_ref, bh_ref, o_ref, *, P, Mb):
    y3 = jnp.dot(x_ref[...], w3_ref[...], preferred_element_type=jnp.float32)
    y3 = jnp.maximum(y3 + b3_ref[...], 0.0).astype(jnp.bfloat16)
    acc = jnp.dot(y3[0:Mb, :], wh_ref[0], preferred_element_type=jnp.float32)
    for p in range(1, P):
        acc = acc + jnp.dot(y3[p * Mb:(p + 1) * Mb, :], wh_ref[p],
                            preferred_element_type=jnp.float32)
    o_ref[...] = acc + bh_ref[...]


# ----------------------------------------------------------------------------
# Glue: im2col (static strided slicing only; fuses under jit) + layer wrappers
# ----------------------------------------------------------------------------
def conv2d_size_out(size, kernel_size=5, stride=2):
    return (size - (kernel_size - 1) - 1) // stride + 1


def im2col(x_nhwc, k=5, s=2):
    """x: (N, H, W, C) -> patches (N*Ho*Wo, k*k*C) in (kH, kW, Cin) column order."""
    N, H, W, C = x_nhwc.shape
    Ho = (H - k) // s + 1
    Wo = (W - k) // s + 1
    cols = []
    for i in range(k):
        for j in range(k):
            cols.append(x_nhwc[:, i:i + s * Ho:s, j:j + s * Wo:s, :])  # (N,Ho,Wo,C)
    patches = jnp.stack(cols, axis=3)                 # (N, Ho, Wo, k*k, C)
    patches = patches.reshape(N * Ho * Wo, k * k * C)
    return patches, N, Ho, Wo


def _choose_tm(Mp, tm_max=512):
    """Pick an M tile: exact when tiny, capped at tm_max, and >= 2 grid steps
    whenever there is enough work (lets v7x shard the parallel axis)."""
    if Mp < 32:
        return Mp
    ntiles = max(2, _cdiv(Mp, tm_max))
    return min(_round_up(_cdiv(Mp, ntiles), 16), Mp)


def conv_layer_forward(x_nhwc, wmat, bias, cout, *, tm_max=512):
    """One conv+BN+ReLU layer as an im2col GEMM.  x_nhwc is bf16."""
    patches, n, ho, wo = im2col(x_nhwc)               # bf16, (n*ho*wo, K)
    M, K = patches.shape
    Kp, Np = wmat.shape
    Mp0 = _round_up(max(M, 8), 16)
    tm = _choose_tm(Mp0, tm_max)
    grid = _cdiv(Mp0, tm)
    Mp = grid * tm
    patches = jnp.pad(patches, ((0, Mp - M), (0, Kp - K)))  # single bf16 materialization

    out = pl.pallas_call(
        _gemm_bias_relu_kernel,
        out_shape=jax.ShapeDtypeStruct((Mp, Np), jnp.bfloat16),
        grid=(grid,),
        in_specs=[
            pl.BlockSpec((tm, Kp), lambda i: (i, 0)),    # patch tile, pipelined
            pl.BlockSpec((Kp, Np), lambda i: (0, 0)),    # folded weights resident
            pl.BlockSpec((1, Np), lambda i: (0, 0)),     # folded bias resident
        ],
        out_specs=pl.BlockSpec((tm, Np), lambda i: (i, 0)),  # lane-dense bf16 store
        compiler_params=pltpu.CompilerParams(
            dimension_semantics=("parallel",),
            vmem_limit_bytes=32 * 1024 * 1024,
        ),
    )(patches, wmat, bias)
    return out[:M, :cout].reshape(n, ho, wo, cout)


def conv3_head_forward(x_nhwc, w3, b3, wh3, bh, outputs):
    """Fused layer3 (conv+BN+ReLU) + linear head in one pallas_call."""
    batch = x_nhwc.shape[0]
    patches, _, ho, wo = im2col(x_nhwc)               # rows ordered (b, p)
    P = ho * wo
    K3 = patches.shape[1]
    Kp3, N3p = w3.shape
    Nop = bh.shape[-1]
    Mb = _round_up(max(batch, 8), 16)
    # Regroup rows (b, p) -> (p, b); each kernel-position group becomes a
    # contiguous Mb-row slab so the head flatten needs only static slices.
    patches = patches.reshape(batch, P, K3).transpose(1, 0, 2)
    patches = jnp.pad(patches, ((0, 0), (0, Mb - batch), (0, Kp3 - K3)))
    patches = patches.reshape(P * Mb, Kp3)

    kernel = functools.partial(_conv3_head_kernel, P=P, Mb=Mb)
    out = pl.pallas_call(
        kernel,
        out_shape=jax.ShapeDtypeStruct((Mb, Nop), jnp.float32),
        grid=(1,),
        in_specs=[
            pl.BlockSpec((P * Mb, Kp3), lambda i: (0, 0)),   # layer3 patches
            pl.BlockSpec((Kp3, N3p), lambda i: (0, 0)),      # folded conv3 weights
            pl.BlockSpec((1, N3p), lambda i: (0, 0)),        # folded conv3 bias
            pl.BlockSpec((P, N3p, Nop), lambda i: (0, 0, 0)),  # head weight slabs
            pl.BlockSpec((1, Nop), lambda i: (0, 0)),        # head bias
        ],
        out_specs=pl.BlockSpec((Mb, Nop), lambda i: (0, 0)),
        compiler_params=pltpu.CompilerParams(
            dimension_semantics=("arbitrary",),
            vmem_limit_bytes=32 * 1024 * 1024,
        ),
    )(patches, w3, b3, wh3, bh)
    return out[:batch, :outputs]


# ----------------------------------------------------------------------------
# One-time parameter preparation: fold BN, pad K->128 / N->128, cast bf16,
# permute + slab the head weights.
# ----------------------------------------------------------------------------
def prepare_params(params, h, w, eps=1e-5):
    def prep_conv(layer):
        wgt, bias, gamma, beta, rmean, rvar = layer
        Cout, Cin, kH, kW = wgt.shape
        scale = gamma / jnp.sqrt(rvar + eps)
        shift = beta - rmean * scale
        # (kH, kW, Cin) -> Cout column layout matching im2col
        wmat = jnp.transpose(wgt, (2, 3, 1, 0)).reshape(kH * kW * Cin, Cout)
        wmat = wmat * scale[None, :]                  # fold BN scale into weights
        bfold = bias * scale + shift                  # fold BN shift into bias
        K = kH * kW * Cin
        Kp = _round_up(K, 128)                        # full-lane K
        Np = _round_up(Cout, 128)
        wmat = jnp.pad(wmat, ((0, Kp - K), (0, Np - Cout))).astype(jnp.bfloat16)
        bfold = jnp.pad(bfold, (0, Np - Cout)).reshape(1, Np).astype(jnp.float32)
        return wmat, bfold, Cout

    prepped = {
        "layer1": prep_conv(params["layer1"]),
        "layer2": prep_conv(params["layer2"]),
        "layer3": prep_conv(params["layer3"]),
    }

    # Head: permute rows from PyTorch (c, h, w) flatten order to NHWC (h, w, c)
    # order, transpose to (lin_in, outputs), then split into per-spatial-position
    # slabs (P, c3, outputs) padded to (P, 128, 128) to match the fused kernel.
    w_head, b_head = params["head"]
    outputs, lin_in = w_head.shape
    convw = conv2d_size_out(conv2d_size_out(conv2d_size_out(w)))
    convh = conv2d_size_out(conv2d_size_out(conv2d_size_out(h)))
    c3 = 32
    P = convh * convw
    w_perm = w_head.reshape(outputs, c3, convh, convw)
    w_perm = jnp.transpose(w_perm, (0, 2, 3, 1)).reshape(outputs, lin_in)
    wmat_h = w_perm.T.reshape(P, c3, outputs)         # (P, 32, outputs)
    N3p = _round_up(c3, 128)
    Nop = _round_up(outputs, 128)
    wmat_h = jnp.pad(wmat_h, ((0, 0), (0, N3p - c3), (0, Nop - outputs)))
    wmat_h = wmat_h.astype(jnp.bfloat16)
    b_h = jnp.pad(b_head, (0, Nop - outputs)).reshape(1, Nop).astype(jnp.float32)
    prepped["head"] = (wmat_h, b_h, outputs)
    return prepped


# ----------------------------------------------------------------------------
# Forward pass (run under a single jax.jit)
# ----------------------------------------------------------------------------
def dqn_forward(x_nchw, prepped):
    """Input layout: NCHW (PyTorch). Returns (N, outputs) float32."""
    x = jnp.transpose(x_nchw, (0, 2, 3, 1)).astype(jnp.bfloat16)   # NHWC, bf16 once
    for name in ("layer1", "layer2"):
        wmat, bias, cout = prepped[name]
        x = conv_layer_forward(x, wmat, bias, cout)
    w3, b3, _ = prepped["layer3"]
    wh3, bh, outputs = prepped["head"]
    return conv3_head_forward(x, w3, b3, wh3, bh, outputs)


# Pure-JAX f32 reference (PyTorch semantics, un-folded BN) for validation.
def dqn_forward_ref(x_nchw, params, eps=1e-5):
    x = jnp.transpose(x_nchw, (0, 2, 3, 1))
    for name in ("layer1", "layer2", "layer3"):
        wgt, bias, gamma, beta, rmean, rvar = params[name]
        cout, cin, kh, kw = wgt.shape
        patches, n, ho, wo = im2col(x, k=kh, s=2)
        wmat = jnp.transpose(wgt, (2, 3, 1, 0)).reshape(kh * kw * cin, cout)
        y = patches @ wmat + bias[None, :]
        scale = gamma / jnp.sqrt(rvar + eps)
        shift = beta - rmean * scale
        y = jnp.maximum(y * scale + shift, 0.0)
        x = y.reshape(n, ho, wo, cout)
    n = x.shape[0]
    x_flat = jnp.transpose(x, (0, 3, 1, 2)).reshape(n, -1)  # PyTorch view(N,-1) order
    w_head, b_head = params["head"]
    return x_flat @ w_head.T + b_head[None, :]


# ----------------------------------------------------------------------------
# Deterministic synthetic parameter construction
# ----------------------------------------------------------------------------
def make_params(key, h, w, outputs):
    def conv_layer(k, cin, cout):
        ks = jax.random.split(k, 6)
        wgt = jax.random.normal(ks[0], (cout, cin, 5, 5), jnp.float32) * 0.05
        b = jax.random.normal(ks[1], (cout,), jnp.float32) * 0.05
        gamma = 1.0 + 0.1 * jax.random.normal(ks[2], (cout,), jnp.float32)
        beta = 0.1 * jax.random.normal(ks[3], (cout,), jnp.float32)
        rmean = 0.1 * jax.random.normal(ks[4], (cout,), jnp.float32)
        rvar = jax.random.uniform(ks[5], (cout,), jnp.float32, 0.5, 1.5)
        return (wgt, b, gamma, beta, rmean, rvar)

    k1, k2, k3, k4, k5 = jax.random.split(key, 5)
    convw = conv2d_size_out(conv2d_size_out(conv2d_size_out(w)))
    convh = conv2d_size_out(conv2d_size_out(conv2d_size_out(h)))
    lin_in = convw * convh * 32
    return {
        "layer1": conv_layer(k1, 3, 16),
        "layer2": conv_layer(k2, 16, 32),
        "layer3": conv_layer(k3, 32, 32),
        "head": (
            jax.random.normal(k4, (outputs, lin_in), jnp.float32) * 0.05,
            jax.random.normal(k5, (outputs,), jnp.float32) * 0.05,
        ),
    }


# ----------------------------------------------------------------------------
if __name__ == "__main__":
    key = jax.random.PRNGKey(0)
    kp, kx = jax.random.split(key)

    batch, h, w, outputs = 2, 32, 32, 4     # 32 -> 14 -> 5 -> 1 spatially
    raw_params = make_params(kp, h, w, outputs)
    prepped = prepare_params(raw_params, h, w)

    x = jax.random.normal(kx, (batch, 3, h, w), jnp.float32)  # NCHW input

    forward = jax.jit(functools.partial(dqn_forward, prepped=prepped))
    q_values = forward(x)
    jax.block_until_ready(q_values)

    assert q_values.shape == (batch, outputs)
    assert bool(jnp.all(jnp.isfinite(q_values)))

    # Validate against the pure-JAX f32 reference (bf16 matmul + bf16
    # intermediate-storage tolerance).
    q_ref = dqn_forward_ref(x, raw_params)
    max_err = float(jnp.max(jnp.abs(q_values - q_ref)))
    assert max_err < 5e-2, f"max abs error {max_err}"

    print("KERNEL_OK")
</pallas_src>

<mosaic_0001>
module attributes {stable_mosaic.version = 11 : i64} {
  func.func @_gemm_bias_relu_kernel(%arg0: i32, %arg1: memref<208x128xbf16, #tpu.memory_space<vmem>>, %arg2: memref<128x128xbf16, #tpu.memory_space<vmem>>, %arg3: memref<1x128xf32, #tpu.memory_space<vmem>>, %arg4: memref<208x128xbf16, #tpu.memory_space<vmem>>) attributes {dimension_semantics = [#tpu.dimension_semantics<parallel>], iteration_bounds = array<i64: 2>, scalar_prefetch = 0 : i64, scratch_operands = 0 : i64, tpu.core_type = #tpu.core_type<tc>, window_params = [{transform_indices = @transform_0, window_bounds = array<i64: 208, 128>}, {pipeline_mode = #tpu.pipeline_mode<synchronous>, transform_indices = @transform_1, window_bounds = array<i64: 128, 128>}, {pipeline_mode = #tpu.pipeline_mode<synchronous>, transform_indices = @transform_2, window_bounds = array<i64: 1, 128>}, {transform_indices = @transform_3, window_bounds = array<i64: 208, 128>}]} {
    %c0 = arith.constant 0 : index
    %c0_0 = arith.constant 0 : index
    %0 = vector.load %arg1[%c0, %c0_0] : memref<208x128xbf16, #tpu.memory_space<vmem>>, vector<208x128xbf16>
    %c0_1 = arith.constant 0 : index
    %c0_2 = arith.constant 0 : index
    %1 = vector.load %arg2[%c0_1, %c0_2] : memref<128x128xbf16, #tpu.memory_space<vmem>>, vector<128x128xbf16>
    %cst = arith.constant dense<0.000000e+00> : vector<208x128xf32>
    %2 = tpu.matmul %0, %1, %cst {dimension_numbers = #tpu.dot_dimension_numbers<[1], [0], [0], [1], [0, 0, 1, 1], [], []>} : vector<208x128xbf16>, vector<128x128xbf16>, vector<208x128xf32> -> vector<208x128xf32>
    %c0_3 = arith.constant 0 : index
    %c0_4 = arith.constant 0 : index
    %3 = vector.load %arg3[%c0_3, %c0_4] : memref<1x128xf32, #tpu.memory_space<vmem>>, vector<1x128xf32>
    %4 = vector.broadcast %3 : vector<1x128xf32> to vector<208x128xf32>
    %5 = arith.addf %2, %4 : vector<208x128xf32>
    %cst_5 = arith.constant 0.000000e+00 : f32
    %6 = vector.broadcast %cst_5 : f32 to vector<208x128xf32>
    %7 = arith.maximumf %5, %6 : vector<208x128xf32>
    %8 = arith.truncf %7 : vector<208x128xf32> to vector<208x128xbf16>
    %c0_6 = arith.constant 0 : index
    %c0_7 = arith.constant 0 : index
    %9 = vector.load %arg4[%c0_6, %c0_7] : memref<208x128xbf16, #tpu.memory_space<vmem>>, vector<208x128xbf16>
    tpu.vector_store %arg4[%c0_6, %c0_7], %8 {strides = array<i32>} : memref<208x128xbf16, #tpu.memory_space<vmem>>, vector<208x128xbf16>,
    return
  }
  func.func @transform_0(%arg0: i32) -> (i32, i32) {
    %c0_i32 = arith.constant 0 : i32
    %c0_i32_0 = arith.constant 0 : i32
    return %arg0, %c0_i32 : i32, i32
  }
  func.func @transform_1(%arg0: i32) -> (i32, i32) {
    %c0_i32 = arith.constant 0 : i32
    %c0_i32_0 = arith.constant 0 : i32
    %c0_i32_1 = arith.constant 0 : i32
    return %c0_i32, %c0_i32_0 : i32, i32
  }
  func.func @transform_2(%arg0: i32) -> (i32, i32) {
    %c0_i32 = arith.constant 0 : i32
    %c0_i32_0 = arith.constant 0 : i32
    %c0_i32_1 = arith.constant 0 : i32
    return %c0_i32, %c0_i32_0 : i32, i32
  }
  func.func @transform_3(%arg0: i32) -> (i32, i32) {
    %c0_i32 = arith.constant 0 : i32
    %c0_i32_0 = arith.constant 0 : i32
    return %arg0, %c0_i32 : i32, i32
  }
}

module attributes {stable_mosaic.version = 11 : i64} {
  func.func @_gemm_bias_relu_kernel(%arg0: i32, %arg1: memref<32x512xbf16, #tpu.memory_space<vmem>>, %arg2: memref<512x128xbf16, #tpu.memory_space<vmem>>, %arg3: memref<1x128xf32, #tpu.memory_space<vmem>>, %arg4: memref<32x128xbf16, #tpu.memory_space<vmem>>) attributes {dimension_semantics = [#tpu.dimension_semantics<parallel>], iteration_bounds = array<i64: 2>, scalar_prefetch = 0 : i64, scratch_operands = 0 : i64, tpu.core_type = #tpu.core_type<tc>, window_params = [{transform_indices = @transform_0, window_bounds = array<i64: 32, 512>}, {pipeline_mode = #tpu.pipeline_mode<synchronous>, transform_indices = @transform_1, window_bounds = array<i64: 512, 128>}, {pipeline_mode = #tpu.pipeline_mode<synchronous>, transform_indices = @transform_2, window_bounds = array<i64: 1, 128>}, {transform_indices = @transform_3, window_bounds = array<i64: 32, 128>}]} {
    %c0 = arith.constant 0 : index
    %c0_0 = arith.constant 0 : index
    %0 = vector.load %arg1[%c0, %c0_0] : memref<32x512xbf16, #tpu.memory_space<vmem>>, vector<32x512xbf16>
    %c0_1 = arith.constant 0 : index
    %c0_2 = arith.constant 0 : index
    %1 = vector.load %arg2[%c0_1, %c0_2] : memref<512x128xbf16, #tpu.memory_space<vmem>>, vector<512x128xbf16>
    %cst = arith.constant dense<0.000000e+00> : vector<32x128xf32>
    %2 = tpu.matmul %0, %1, %cst {dimension_numbers = #tpu.dot_dimension_numbers<[1], [0], [0], [1], [0, 0, 1, 1], [], []>} : vector<32x512xbf16>, vector<512x128xbf16>, vector<32x128xf32> -> vector<32x128xf32>
    %c0_3 = arith.constant 0 : index
    %c0_4 = arith.constant 0 : index
    %3 = vector.load %arg3[%c0_3, %c0_4] : memref<1x128xf32, #tpu.memory_space<vmem>>, vector<1x128xf32>
    %4 = vector.broadcast %3 : vector<1x128xf32> to vector<32x128xf32>
    %5 = arith.addf %2, %4 : vector<32x128xf32>
    %cst_5 = arith.constant 0.000000e+00 : f32
    %6 = vector.broadcast %cst_5 : f32 to vector<32x128xf32>
    %7 = arith.maximumf %5, %6 : vector<32x128xf32>
    %8 = arith.truncf %7 : vector<32x128xf32> to vector<32x128xbf16>
    %c0_6 = arith.constant 0 : index
    %c0_7 = arith.constant 0 : index
    %9 = vector.load %arg4[%c0_6, %c0_7] : memref<32x128xbf16, #tpu.memory_space<vmem>>, vector<32x128xbf16>
    tpu.vector_store %arg4[%c0_6, %c0_7], %8 {strides = array<i32>} : memref<32x128xbf16, #tpu.memory_space<vmem>>, vector<32x128xbf16>,
    return
  }
  func.func @transform_0(%arg0: i32) -> (i32, i32) {
    %c0_i32 = arith.constant 0 : i32
    %c0_i32_0 = arith.constant 0 : i32
    return %arg0, %c0_i32 : i32, i32
  }
  func.func @transform_1(%arg0: i32) -> (i32, i32) {
    %c0_i32 = arith.constant 0 : i32
    %c0_i32_0 = arith.constant 0 : i32
    %c0_i32_1 = arith.constant 0 : i32
    return %c0_i32, %c0_i32_0 : i32, i32
  }
  func.func @transform_2(%arg0: i32) -> (i32, i32) {
    %c0_i32 = arith.constant 0 : i32
    %c0_i32_0 = arith.constant 0 : i32
    %c0_i32_1 = arith.constant 0 : i32
    return %c0_i32, %c0_i32_0 : i32, i32
  }
  func.func @transform_3(%arg0: i32) -> (i32, i32) {
    %c0_i32 = arith.constant 0 : i32
    %c0_i32_0 = arith.constant 0 : i32
    return %arg0, %c0_i32 : i32, i32
  }
}

module attributes {stable_mosaic.version = 11 : i64} {
  func.func @_conv3_head_kernel(%arg0: i32, %arg1: memref<16x896xbf16, #tpu.memory_space<vmem>>, %arg2: memref<896x128xbf16, #tpu.memory_space<vmem>>, %arg3: memref<1x128xf32, #tpu.memory_space<vmem>>, %arg4: memref<1x128x128xbf16, #tpu.memory_space<vmem>>, %arg5: memref<1x128xf32, #tpu.memory_space<vmem>>, %arg6: memref<16x128xf32, #tpu.memory_space<vmem>>) attributes {dimension_semantics = [#tpu.dimension_semantics<arbitrary>], iteration_bounds = array<i64: 1>, scalar_prefetch = 0 : i64, scratch_operands = 0 : i64, tpu.core_type = #tpu.core_type<tc>, window_params = [{pipeline_mode = #tpu.pipeline_mode<synchronous>, transform_indices = @transform_0, window_bounds = array<i64: 16, 896>}, {pipeline_mode = #tpu.pipeline_mode<synchronous>, transform_indices = @transform_1, window_bounds = array<i64: 896, 128>}, {pipeline_mode = #tpu.pipeline_mode<synchronous>, transform_indices = @transform_2, window_bounds = array<i64: 1, 128>}, {pipeline_mode = #tpu.pipeline_mode<synchronous>, transform_indices = @transform_3, window_bounds = array<i64: 1, 128, 128>}, {pipeline_mode = #tpu.pipeline_mode<synchronous>, transform_indices = @transform_4, window_bounds = array<i64: 1, 128>}, {pipeline_mode = #tpu.pipeline_mode<synchronous>, transform_indices = @transform_5, window_bounds = array<i64: 16, 128>}]} {
    %c0 = arith.constant 0 : index
    %c0_0 = arith.constant 0 : index
    %0 = vector.load %arg1[%c0, %c0_0] : memref<16x896xbf16, #tpu.memory_space<vmem>>, vector<16x896xbf16>
    %c0_1 = arith.constant 0 : index
    %c0_2 = arith.constant 0 : index
    %1 = vector.load %arg2[%c0_1, %c0_2] : memref<896x128xbf16, #tpu.memory_space<vmem>>, vector<896x128xbf16>
    %cst = arith.constant dense<0.000000e+00> : vector<16x128xf32>
    %2 = tpu.matmul %0, %1, %cst {dimension_numbers = #tpu.dot_dimension_numbers<[1], [0], [0], [1], [0, 0, 1, 1], [], []>} : vector<16x896xbf16>, vector<896x128xbf16>, vector<16x128xf32> -> vector<16x128xf32>
    %c0_3 = arith.constant 0 : index
    %c0_4 = arith.constant 0 : index
    %3 = vector.load %arg3[%c0_3, %c0_4] : memref<1x128xf32, #tpu.memory_space<vmem>>, vector<1x128xf32>
    %4 = vector.broadcast %3 : vector<1x128xf32> to vector<16x128xf32>
    %5 = arith.addf %2, %4 : vector<16x128xf32>
    %cst_5 = arith.constant 0.000000e+00 : f32
    %6 = vector.broadcast %cst_5 : f32 to vector<16x128xf32>
    %7 = arith.maximumf %5, %6 : vector<16x128xf32>
    %8 = arith.truncf %7 : vector<16x128xf32> to vector<16x128xbf16>
    %c0_6 = arith.constant 0 : index
    %c0_7 = arith.constant 0 : index
    %c0_8 = arith.constant 0 : index
    %9 = vector.load %arg4[%c0_6, %c0_7, %c0_8] : memref<1x128x128xbf16, #tpu.memory_space<vmem>>, vector<1x128x128xbf16>
    %10 = vector.shape_cast %9 : vector<1x128x128xbf16> to vector<128x128xbf16>
    %cst_9 = arith.constant dense<0.000000e+00> : vector<16x128xf32>
    %11 = tpu.matmul %8, %10, %cst_9 {dimension_numbers = #tpu.dot_dimension_numbers<[1], [0], [0], [1], [0, 0, 1, 1], [], []>} : vector<16x128xbf16>, vector<128x128xbf16>, vector<16x128xf32> -> vector<16x128xf32>
    %c0_10 = arith.constant 0 : index
    %c0_11 = arith.constant 0 : index
    %12 = vector.load %arg5[%c0_10, %c0_11] : memref<1x128xf32, #tpu.memory_space<vmem>>, vector<1x128xf32>
    %13 = vector.broadcast %12 : vector<1x128xf32> to vector<16x128xf32>
    %14 = arith.addf %11, %13 : vector<16x128xf32>
    %c0_12 = arith.constant 0 : index
    %c0_13 = arith.constant 0 : index
    %15 = vector.load %arg6[%c0_12, %c0_13] : memref<16x128xf32, #tpu.memory_space<vmem>>, vector<16x128xf32>
    tpu.vector_store %arg6[%c0_12, %c0_13], %14 {strides = array<i32>} : memref<16x128xf32, #tpu.memory_space<vmem>>, vector<16x128xf32>,
    return
  }
  func.func @transform_0(%arg0: i32) -> (i32, i32) {
    %c0_i32 = arith.constant 0 : i32
    %c0_i32_0 = arith.constant 0 : i32
    %c0_i32_1 = arith.constant 0 : i32
    return %c0_i32, %c0_i32_0 : i32, i32
  }
  func.func @transform_1(%arg0: i32) -> (i32, i32) {
    %c0_i32 = arith.constant 0 : i32
    %c0_i32_0 = arith.constant 0 : i32
    %c0_i32_1 = arith.constant 0 : i32
    return %c0_i32, %c0_i32_0 : i32, i32
  }
  func.func @transform_2(%arg0: i32) -> (i32, i32) {
    %c0_i32 = arith.constant 0 : i32
    %c0_i32_0 = arith.constant 0 : i32
    %c0_i32_1 = arith.constant 0 : i32
    return %c0_i32, %c0_i32_0 : i32, i32
  }
  func.func @transform_3(%arg0: i32) -> (i32, i32, i32) {
    %c0_i32 = arith.constant 0 : i32
    %c0_i32_0 = arith.constant 0 : i32
    %c0_i32_1 = arith.constant 0 : i32
    %c0_i32_2 = arith.constant 0 : i32
    return %c0_i32, %c0_i32_0, %c0_i32_1 : i32, i32, i32
  }
  func.func @transform_4(%arg0: i32) -> (i32, i32) {
    %c0_i32 = arith.constant 0 : i32
    %c0_i32_0 = arith.constant 0 : i32
    %c0_i32_1 = arith.constant 0 : i32
    return %c0_i32, %c0_i32_0 : i32, i32
  }
  func.func @transform_5(%arg0: i32) -> (i32, i32) {
    %c0_i32 = arith.constant 0 : i32
    %c0_i32_0 = arith.constant 0 : i32
    %c0_i32_1 = arith.constant 0 : i32
    return %c0_i32, %c0_i32_0 : i32, i32
  }
}

</mosaic_0001>

<llo_original>
// kernel: dqn_forward.3
$region0: #{dqn_forward.3}
  #allocation0 [shape = 'u32[]', space=smem, size = 0x4, offset = 0x4, fixed_abs, tag = 'smem constant byte address 0x4 - core index']
  #allocation1 [shape = 'u32[144,128]{1,0:T(1,128)}', space=vmem, size = 0x12000, scoped, tag = 'internal scratch']
  %s0 = inlined_call_operand.vmem [shape: bf16[416,128], index: 0, kind: input, shape index: {}]
  %s1 = inlined_call_operand.vmem [shape: bf16[128,128], index: 1, kind: input, shape index: {}]
  %s2 = inlined_call_operand.vmem [shape: f32[1,128], index: 2, kind: input, shape index: {}]
  %s3 = inlined_call_operand.vmem [shape: bf16[416,128], index: 3, kind: output, shape index: {}]
  %s4 = sld [smem:[#allocation0]]
  $region45: #{dqn_forward.3} parent=0
    _
  %s6 = ssub.s32 1, %s4
  %s7 = scalar_select 0, %s6, %s4
  loop: start=0, step=1, limit=4
  $region2: #{dqn_forward.3} parent=0 // loop_pre_header
    _
  $region3: #{dqn_forward.3} parent=0 // loop_header
    %s9 = sphi 0, %s13
    %p10 = scmp.ge.s32.totalorder %s9, 4
    %s19 = sphi 0, %s21
    %s22 = sphi 0, %s19
    %s23 = sphi 0, %s22
    %s39 = sphi 0, %s23
    %s43 = sphi 0, %s43
    %s45 = sphi 0, %s43
    %s46 = sphi 0, %s45
    %s60 = sphi 0, %s46
    %s64 = sphi 0, %s64
    %s66 = sphi 0, %s64
    %s67 = sphi 0, %s66
    %s81 = sphi 0, %s67
    %s87 = sphi 0, %s89
    %s90 = sphi 0, %s87
    %s91 = sphi 0, %s90
    %s107 = sphi 0, %s91
  $region4: #{dqn_forward.3} parent=0 // loop_header_branch
    %12 = sbr.rel (%p10) target = $region8
  $region5: #{dqn_forward.3} parent=0 // loop_body
    %s14 = ssub.s32 %s9, 1
    %s15 = ssub.s32 %s9, 2
    %s16 = sadd.s32 %s9, 1
    %s17 = ssub.s32 %s9, %s16
    %p18 = scmp.eq.s32.totalorder %s17, 0
    %s20 = sadd.s32 %s19, 1
    %s21 = scalar_select %p18, %s19, %s20
    %p24 = pneg %p18
    %p25 = scmp.eq.s32.totalorder %s9, 1
    %p26 = por %p24, %p25
    %p27 = scmp.ne.s32.totalorder %s19, %s22
    %p28 = scmp.eq.s32.totalorder %s9, 0
    %p29 = por %p27, %p28
    %p30 = scmp.ne.s32.totalorder %s19, %s22
    %p31 = scmp.eq.s32.totalorder %s14, 1
    %p32 = por %p30, %p31
    %p33 = scmp.ne.s32.totalorder %s22, %s23
    %p34 = scmp.eq.s32.totalorder %s14, 0
    %p35 = por %p33, %p34
    %p36 = scmp.ne.s32.totalorder %s22, %s23
    %p37 = scmp.eq.s32.totalorder %s15, 1
    %p38 = por %p36, %p37
    %p40 = scmp.ne.s32.totalorder %s23, %s39
    %p41 = scmp.eq.s32.totalorder %s15, 0
    %p42 = por %p40, %p41
    %s44 = sadd.s32 %s43, 1
    %p47 = scmp.eq.s32.totalorder %s9, 1
    %p48 = scmp.ne.s32.totalorder %s43, %s45
    %p49 = scmp.eq.s32.totalorder %s9, 0
    %p50 = por %p48, %p49
    %p51 = scmp.ne.s32.totalorder %s43, %s45
    %p52 = scmp.eq.s32.totalorder %s14, 1
    %p53 = por %p51, %p52
    %p54 = scmp.ne.s32.totalorder %s45, %s46
    %p55 = scmp.eq.s32.totalorder %s14, 0
    %p56 = por %p54, %p55
    %p57 = scmp.ne.s32.totalorder %s45, %s46
    %p58 = scmp.eq.s32.totalorder %s15, 1
    %p59 = por %p57, %p58
    %p61 = scmp.ne.s32.totalorder %s46, %s60
    %p62 = scmp.eq.s32.totalorder %s15, 0
    %p63 = por %p61, %p62
    %s65 = sadd.s32 %s64, 1
    %p68 = scmp.eq.s32.totalorder %s9, 1
    %p69 = scmp.ne.s32.totalorder %s64, %s66
    %p70 = scmp.eq.s32.totalorder %s9, 0
    %p71 = por %p69, %p70
    %p72 = scmp.ne.s32.totalorder %s64, %s66
    %p73 = scmp.eq.s32.totalorder %s14, 1
    %p74 = por %p72, %p73
    %p75 = scmp.ne.s32.totalorder %s66, %s67
    %p76 = scmp.eq.s32.totalorder %s14, 0
    %p77 = por %p75, %p76
    %p78 = scmp.ne.s32.totalorder %s66, %s67
    %p79 = scmp.eq.s32.totalorder %s15, 1
    %p80 = por %p78, %p79
    %p82 = scmp.ne.s32.totalorder %s67, %s81
    %p83 = scmp.eq.s32.totalorder %s15, 0
    %p84 = por %p82, %p83
    %s85 = ssub.s32 %s9, %s16
    %p86 = scmp.eq.s32.totalorder %s85, 0
    %s88 = sadd.s32 %s87, 1
    %s89 = scalar_select %p86, %s87, %s88
    %p92 = pneg %p86
    %p93 = scmp.eq.s32.totalorder %s9, 1
    %p94 = por %p92, %p93
    %p95 = scmp.ne.s32.totalorder %s87, %s90
    %p96 = scmp.eq.s32.totalorder %s9, 0
    %p97 = por %p95, %p96
    %p98 = scmp.ne.s32.totalorder %s87, %s90
    %p99 = scmp.eq.s32.totalorder %s14, 1
    %p100 = por %p98, %p99
    %p101 = scmp.ne.s32.totalorder %s90, %s91
    %p102 = scmp.eq.s32.totalorder %s14, 0
    %p103 = por %p101, %p102
    %p104 = scmp.ne.s32.totalorder %s90, %s91
    %p105 = scmp.eq.s32.totalorder %s15, 1
    %p106 = por %p104, %p105
    %p108 = scmp.ne.s32.totalorder %s91, %s107
    %p109 = scmp.eq.s32.totalorder %s15, 0
    %p110 = por %p108, %p109
    %p111 = scmp.le.s32.totalorder 1, %s9
    %p112 = scmp.lt.s32.totalorder %s9, 3
    %p113 = pnand %p111, %p112
    %p114 = pneg %p113
    // Predicated region
    $region9: #{dqn_forward.3} parent=5 // pred_check
      _
    $region10: #{dqn_forward.3} parent=5 // pred_check_branch
      %116 = sbr.rel (%p113) target = $region12
    $region11: #{dqn_forward.3} parent=5 // pred_region
      %s117 = ssub.s32 %s9, 1
      // Predicated region
      $region13: #{dqn_forward.3} parent=11 // pred_check
        %p118 = pneg %p56
      $region14: #{dqn_forward.3} parent=11 // pred_check_branch
        %120 = sbr.rel (%p118) target = $region16
      $region15: #{dqn_forward.3} parent=11 // pred_region
        _
      $region16: #{dqn_forward.3} parent=11 // pred_fallthru
        _
      // Predicated region
      $region17: #{dqn_forward.3} parent=11 // pred_check
        %p121 = pneg %p77
      $region18: #{dqn_forward.3} parent=11 // pred_check_branch
        %123 = sbr.rel (%p121) target = $region20
      $region19: #{dqn_forward.3} parent=11 // pred_region
        _
      $region20: #{dqn_forward.3} parent=11 // pred_fallthru
        _
    $region12: #{dqn_forward.3} parent=5 // pred_fallthru
      _
    %p124 = scmp.lt.s32.totalorder %s9, 2
    // Predicated region
    $region21: #{dqn_forward.3} parent=5 // pred_check
      %p125 = pneg %p124
    $region22: #{dqn_forward.3} parent=5 // pred_check_branch
      %127 = sbr.rel (%p125) target = $region24
    $region23: #{dqn_forward.3} parent=5 // pred_region
      // Predicated region
      $region25: #{dqn_forward.3} parent=23 // pred_check
        %p128 = pneg %p29
      $region26: #{dqn_forward.3} parent=23 // pred_check_branch
        %130 = sbr.rel (%p128) target = $region28
      $region27: #{dqn_forward.3} parent=23 // pred_region
        %s131 = smul.u32 26, %s9
        %p132 = scmp.lt.s32.totalorder %s131, 51
        %s133 = scalar_select %p132, %s131, 51
        %s134 = smul.addr %s133, 4
        %s135 = scalar_lea.vmem %s0, %s134
        %s136 = smul.u32 26, %s9
      $region28: #{dqn_forward.3} parent=23 // pred_fallthru
        _
    $region24: #{dqn_forward.3} parent=5 // pred_fallthru
      _
    %p137 = scmp.le.s32.totalorder 1, %s9
    %p138 = scmp.lt.s32.totalorder %s9, 3
    %p139 = pnand %p137, %p138
    %p140 = pneg %p139
    // Predicated region
    $region29: #{dqn_forward.3} parent=5 // pred_check
      _
    $region30: #{dqn_forward.3} parent=5 // pred_check_branch
      %142 = sbr.rel (%p139) target = $region32
    $region31: #{dqn_forward.3} parent=5 // pred_region
      %s143 = ssub.s32 %s9, 1
      %s144 = smul.u32 26, %s14
      %p145 = scmp.lt.s32.totalorder %s144, 51
      %s146 = scalar_select %p145, %s144, 51
      %s147 = smul.addr %s146, 4
      %s148 = scalar_lea.vmem %s0, %s147
      %p149 = pneg %p35
      %p150 = pneg %p32
      %p151 = pneg %p56
      %p152 = pneg %p53
      %p153 = pneg %p77
      %p154 = pneg %p74
      %p155 = pneg %p103
      %p156 = pneg %p100
      %s157 = smul.u32 26, %s14
      %p158 = scmp.lt.s32.totalorder %s157, 51
      %s159 = scalar_select %p158, %s157, 51
      %s160 = smul.addr %s159, 4
      %s161 = scalar_lea.vmem %s3, %s160
      %s162 = smul.u32 26, %s14
      %p163 = scmp.lt.s32.totalorder %s162, 51
      %s164 = scalar_select %p163, %s162, 51
      %s165 = smul.addr %s164, 4
      %s166 = scalar_lea.vmem %s0, %s165
      %s167 = smul.u32 26, %s14
      %s168 = smul.u32 26, %s14
      %p169 = scmp.lt.s32.totalorder %s168, 51
      %s170 = scalar_select %p169, %s168, 51
      %s171 = smul.addr %s170, 4
      %s172 = scalar_lea.vmem %s3, %s171
      %s173 = smul.u32 26, %s14
      %v175 = vld [vmem:[%s166] sm:$0xf]
      %v176 = vld [vmem:[%s166 + $0x4] sm:$0xf]
      %v177 = vld [vmem:[%s166 + $0x8] sm:$0xf]
      %v178 = vld [vmem:[%s166 + $0xc] sm:$0xf]
      %v179 = vld [vmem:[%s166 + $0x10] sm:$0xf]
      %v180 = vld [vmem:[%s166 + $0x14] sm:$0xf]
      %v181 = vld [vmem:[%s166 + $0x18] sm:$0xf]
      %v182 = vld [vmem:[%s166 + $0x1c] sm:$0xf]
      %v183 = vld [vmem:[%s166 + $0x20] sm:$0xf]
      %v184 = vld [vmem:[%s166 + $0x24] sm:$0xf]
      %v185 = vld [vmem:[%s166 + $0x28] sm:$0xf]
      %v186 = vld [vmem:[%s166 + $0x2c] sm:$0xf]
      %v187 = vld [vmem:[%s166 + $0x30] sm:$0xf]
      %v188 = vld [vmem:[%s166 + $0x34] sm:$0xf]
      %v189 = vld [vmem:[%s166 + $0x38] sm:$0xf]
      %v190 = vld [vmem:[%s166 + $0x3c] sm:$0xf]
      %v191 = vld [vmem:[%s166 + $0x40] sm:$0xf]
      %v192 = vld [vmem:[%s166 + $0x44] sm:$0xf]
      %v193 = vld [vmem:[%s166 + $0x48] sm:$0xf]
      %v194 = vld [vmem:[%s166 + $0x4c] sm:$0xf]
      %v195 = vld [vmem:[%s166 + $0x50] sm:$0xf]
      %v196 = vld [vmem:[%s166 + $0x54] sm:$0xf]
      %v197 = vld [vmem:[%s166 + $0x58] sm:$0xf]
      %v198 = vld [vmem:[%s166 + $0x5c] sm:$0xf]
      %v199 = vld [vmem:[%s166 + $0x60] sm:$0xf]
      %v200 = vld [vmem:[%s166 + $0x64] sm:$0xf]
      %v201 = vld [vmem:[%s1] sm:$0xf]
      %v202 = vld [vmem:[%s1 + $0x4] sm:$0xf]
      %v203 = vld [vmem:[%s1 + $0x8] sm:$0xf]
      %v204 = vld [vmem:[%s1 + $0xc] sm:$0xf]
      %v205 = vld [vmem:[%s1 + $0x10] sm:$0xf]
      %v206 = vld [vmem:[%s1 + $0x14] sm:$0xf]
      %v207 = vld [vmem:[%s1 + $0x18] sm:$0xf]
      %v208 = vld [vmem:[%s1 + $0x1c] sm:$0xf]
      %v209 = vld [vmem:[%s1 + $0x20] sm:$0xf]
      %v210 = vld [vmem:[%s1 + $0x24] sm:$0xf]
      %v211 = vld [vmem:[%s1 + $0x28] sm:$0xf]
      %v212 = vld [vmem:[%s1 + $0x2c] sm:$0xf]
      %v213 = vld [vmem:[%s1 + $0x30] sm:$0xf]
      %v214 = vld [vmem:[%s1 + $0x34] sm:$0xf]
      %v215 = vld [vmem:[%s1 + $0x38] sm:$0xf]
      %v216 = vld [vmem:[%s1 + $0x3c] sm:$0xf]
      %v217 = vld [vmem:[%s2] sm:$0x1]
      %v219 = vlaneseq
      %v220 = vshrl.u32 %v219, 7
      %v221 = vsub.s32 0, %v220
      %v222 = vrot.slane %v217, %v221
      %v250 = vunpack.c.l.b16 %v175
      %v251 = vunpack.c.l.b16 %v176
      %v252 = vunpack.c.l.b16 %v177
      %v253 = vunpack.c.l.b16 %v178
      %v254 = vunpack.c.l.b16 %v179
      %v255 = vunpack.c.l.b16 %v180
      %v256 = vunpack.c.l.b16 %v181
      %v257 = vunpack.c.l.b16 %v182
      %v258 = vunpack.c.l.b16 %v183
      %v259 = vunpack.c.l.b16 %v184
      %v260 = vunpack.c.l.b16 %v185
      %v261 = vunpack.c.l.b16 %v186
      %v262 = vunpack.c.l.b16 %v187
      %v263 = vunpack.c.l.b16 %v188
      %v264 = vunpack.c.l.b16 %v189
      %v265 = vunpack.c.l.b16 %v190
      %v266 = vunpack.c.l.b16 %v191
      %v267 = vunpack.c.l.b16 %v192
      %v268 = vunpack.c.l.b16 %v193
      %v269 = vunpack.c.l.b16 %v194
      %v270 = vunpack.c.l.b16 %v195
      %v271 = vunpack.c.l.b16 %v196
      %v272 = vunpack.c.l.b16 %v197
      %v273 = vunpack.c.l.b16 %v198
      %v274 = vunpack.c.l.b16 %v199
      %v275 = vunpack.c.l.b16 %v200
      %v276 = vpack.c.b16 %v251, %v250
      %v277 = vpack.c.b16 %v253, %v252
      %v278 = vpack.c.b16 %v255, %v254
      %v279 = vpack.c.b16 %v257, %v256
      %v280 = vpack.c.b16 %v259, %v258
      %v281 = vpack.c.b16 %v261, %v260
      %v282 = vpack.c.b16 %v263, %v262
      %v283 = vpack.c.b16 %v265, %v264
      %v284 = vpack.c.b16 %v267, %v266
      %v285 = vpack.c.b16 %v269, %v268
      %v286 = vpack.c.b16 %v271, %v270
      %v287 = vpack.c.b16 %v273, %v272
      %v288 = vpack.c.b16 %v275, %v274
      %v318 = vunpack.c.l.b16 %v201
      %v319 = vunpack.c.l.b16 %v202
      %v320 = vunpack.c.l.b16 %v203
      %v321 = vunpack.c.l.b16 %v204
      %v322 = vunpack.c.l.b16 %v205
      %v323 = vunpack.c.l.b16 %v206
      %v324 = vunpack.c.l.b16 %v207
      %v325 = vunpack.c.l.b16 %v208
      %v326 = vunpack.c.l.b16 %v209
      %v327 = vunpack.c.l.b16 %v210
      %v328 = vunpack.c.l.b16 %v211
      %v329 = vunpack.c.l.b16 %v212
      %v330 = vunpack.c.l.b16 %v213
      %v331 = vunpack.c.l.b16 %v214
      %v332 = vunpack.c.l.b16 %v215
      %v333 = vunpack.c.l.b16 %v216
      %v334 = vpack.c.b16 %v319, %v318
      %v335 = vpack.c.b16 %v321, %v320
      %v336 = vpack.c.b16 %v323, %v322
      %v337 = vpack.c.b16 %v325, %v324
      %v338 = vpack.c.b16 %v327, %v326
      %v339 = vpack.c.b16 %v329, %v328
      %v340 = vpack.c.b16 %v331, %v330
      %v341 = vpack.c.b16 %v333, %v332
      %350 = vmatprep.subr.bf16.mxu0 0
      %351 = vmatpush1.bf16.msra.mxu0 %v341
      %352 = vmatprep.subr.bf16.mxu0 0
      %353 = vmatpush1.bf16.msra.mxu0 %v340
      %354 = vmatprep.subr.bf16.mxu0 0
      %355 = vmatpush1.bf16.msra.mxu0 %v339
      %356 = vmatprep.subr.bf16.mxu0 0
      %357 = vmatpush1.bf16.msra.mxu0 %v338
      %358 = vmatprep.subr.bf16.mxu0 0
      %359 = vmatpush1.bf16.msra.mxu0 %v337
      %360 = vmatprep.subr.bf16.mxu0 0
      %361 = vmatpush1.bf16.msra.mxu0 %v336
      %362 = vmatprep.subr.bf16.mxu0 0
      %363 = vmatpush1.bf16.msra.mxu0 %v335
      %364 = vmatprep.subr.bf16.mxu0 0
      %365 = vmatpush1.bf16.msra.mxu0 %v334
      %366 = vmatprep.subr.bf16.mxu0 0
      %367 = vmatpush2.bf16.msra.mxu0 0
      %368 = vmatprep.subr.bf16.mxu0 0
      %369 = vmatpush2.bf16.msra.mxu0 0
      %370 = vmatprep.subr.bf16.mxu0 0
      %371 = vmatpush2.bf16.msra.mxu0 0
      %372 = vmatprep.subr.bf16.mxu0 0
      %373 = vmatpush2.bf16.msra.mxu0 0
      %374 = vmatprep.subr.bf16.mxu0 0
      %375 = vmatpush2.bf16.msra.mxu0 0
      %376 = vmatprep.subr.bf16.mxu0 0
      %377 = vmatpush2.bf16.msra.mxu0 0
      %378 = vmatprep.subr.bf16.mxu0 0
      %379 = vmatpush2.bf16.msra.mxu0 0
      %380 = vmatprep.subr.bf16.mxu0 0
      %381 = vmatpush2.bf16.msra.mxu0 0
      %382 = vmatprep.mubr.bf16.mxu0 0
      %383 = vmatmul.mubr.bf16.gmra.mxu0 %v276
      %v384 = vpop.f32.mrf.mxu0
      %v385 = vadd.f32 %v222, %v384
      %v386 = vpop.f32.mrf.mxu0
      %v387 = vpop.f32.mrf.mxu0
      %v388 = vadd.f32 %v222, %v387
      %v389 = vpop.f32.mrf.mxu0
      %390 = vmatprep.mubr.bf16.mxu0 0
      %391 = vmatmul.mubr.bf16.gmra.mxu0 %v277
      %v392 = vpop.f32.mrf.mxu0
      %v393 = vadd.f32 %v222, %v392
      %v394 = vpop.f32.mrf.mxu0
      %v395 = vpop.f32.mrf.mxu0
      %v396 = vadd.f32 %v222, %v395
      %v397 = vpop.f32.mrf.mxu0
      %398 = vmatprep.mubr.bf16.mxu0 0
      %399 = vmatmul.mubr.bf16.gmra.mxu0 %v278
      %v400 = vpop.f32.mrf.mxu0
      %v401 = vadd.f32 %v222, %v400
      %v402 = vpop.f32.mrf.mxu0
      %v403 = vpop.f32.mrf.mxu0
      %v404 = vadd.f32 %v222, %v403
      %v405 = vpop.f32.mrf.mxu0
      %406 = vmatprep.mubr.bf16.mxu0 0
      %407 = vmatmul.mubr.bf16.gmra.mxu0 %v279
      %v408 = vpop.f32.mrf.mxu0
      %v409 = vadd.f32 %v222, %v408
      %v410 = vpop.f32.mrf.mxu0
      %v411 = vpop.f32.mrf.mxu0
      %v412 = vadd.f32 %v222, %v411
      %v413 = vpop.f32.mrf.mxu0
      %414 = vmatprep.mubr.bf16.mxu0 0
      %415 = vmatmul.mubr.bf16.gmra.mxu0 %v280
      %v416 = vpop.f32.mrf.mxu0
      %v417 = vadd.f32 %v222, %v416
      %v418 = vpop.f32.mrf.mxu0
      %v419 = vpop.f32.mrf.mxu0
      %v420 = vadd.f32 %v222, %v419
      %v421 = vpop.f32.mrf.mxu0
      %422 = vmatprep.mubr.bf16.mxu0 0
      %423 = vmatmul.mubr.bf16.gmra.mxu0 %v281
      %v424 = vpop.f32.mrf.mxu0
      %v425 = vadd.f32 %v222, %v424
      %v426 = vpop.f32.mrf.mxu0
      %v427 = vpop.f32.mrf.mxu0
      %v428 = vadd.f32 %v222, %v427
      %v429 = vpop.f32.mrf.mxu0
      %430 = vmatprep.mubr.bf16.mxu0 0
      %431 = vmatmul.mubr.bf16.gmra.mxu0 %v282
      %v432 = vpop.f32.mrf.mxu0
      %v433 = vadd.f32 %v222, %v432
      %v434 = vpop.f32.mrf.mxu0
      %v435 = vpop.f32.mrf.mxu0
      %v436 = vadd.f32 %v222, %v435
      %v437 = vpop.f32.mrf.mxu0
      %438 = vmatprep.mubr.bf16.mxu0 0
      %439 = vmatmul.mubr.bf16.gmra.mxu0 %v283
      %v440 = vpop.f32.mrf.mxu0
      %v441 = vadd.f32 %v222, %v440
      %v442 = vpop.f32.mrf.mxu0
      %v443 = vpop.f32.mrf.mxu0
      %v444 = vadd.f32 %v222, %v443
      %v445 = vpop.f32.mrf.mxu0
      %446 = vmatprep.mubr.bf16.mxu0 0
      %447 = vmatmul.mubr.bf16.gmra.mxu0 %v284
      %v448 = vpop.f32.mrf.mxu0
      %v449 = vadd.f32 %v222, %v448
      %v450 = vpop.f32.mrf.mxu0
      %v451 = vpop.f32.mrf.mxu0
      %v452 = vadd.f32 %v222, %v451
      %v453 = vpop.f32.mrf.mxu0
      %454 = vmatprep.mubr.bf16.mxu0 0
      %455 = vmatmul.mubr.bf16.gmra.mxu0 %v285
      %v456 = vpop.f32.mrf.mxu0
      %v457 = vadd.f32 %v222, %v456
      %v458 = vpop.f32.mrf.mxu0
      %v459 = vpop.f32.mrf.mxu0
      %v460 = vadd.f32 %v222, %v459
      %v461 = vpop.f32.mrf.mxu0
      %462 = vmatprep.mubr.bf16.mxu0 0
      %463 = vmatmul.mubr.bf16.gmra.mxu0 %v286
      %v464 = vpop.f32.mrf.mxu0
      %v465 = vadd.f32 %v222, %v464
      %v466 = vpop.f32.mrf.mxu0
      %v467 = vpop.f32.mrf.mxu0
      %v468 = vadd.f32 %v222, %v467
      %v469 = vpop.f32.mrf.mxu0
      %470 = vmatprep.mubr.bf16.mxu0 0
      %471 = vmatmul.mubr.bf16.gmra.mxu0 %v287
      %v472 = vpop.f32.mrf.mxu0
      %v473 = vadd.f32 %v222, %v472
      %v474 = vpop.f32.mrf.mxu0
      %v475 = vpop.f32.mrf.mxu0
      %v476 = vadd.f32 %v222, %v475
      %v477 = vpop.f32.mrf.mxu0
      %478 = vmatprep.mubr.bf16.mxu0 0
      %479 = vmatmul.mubr.bf16.gmra.mxu0 %v288
      %v480 = vpop.f32.mrf.mxu0
      %v481 = vadd.f32 %v222, %v480
      %v482 = vpop.f32.mrf.mxu0
      %v483 = vpop.f32.mrf.mxu0
      %v484 = vadd.f32 %v222, %v483
      %v485 = vpop.f32.mrf.mxu0
      %486 = vdwg.mxu0
      %v487 = vmax.f32 %v385, 0.0
      %v488 = vmax.f32 %v388, 0.0
      %v489 = vmax.f32 %v393, 0.0
      %v490 = vmax.f32 %v396, 0.0
      %v491 = vmax.f32 %v401, 0.0
      %v492 = vmax.f32 %v404, 0.0
      %v493 = vmax.f32 %v409, 0.0
      %v494 = vmax.f32 %v412, 0.0
      %v495 = vmax.f32 %v417, 0.0
      %v496 = vmax.f32 %v420, 0.0
      %v497 = vmax.f32 %v425, 0.0
      %v498 = vmax.f32 %v428, 0.0
      %v499 = vmax.f32 %v433, 0.0
      %v500 = vmax.f32 %v436, 0.0
      %v501 = vmax.f32 %v441, 0.0
      %v502 = vmax.f32 %v444, 0.0
      %v503 = vmax.f32 %v449, 0.0
      %v504 = vmax.f32 %v452, 0.0
      %v505 = vmax.f32 %v457, 0.0
      %v506 = vmax.f32 %v460, 0.0
      %v507 = vmax.f32 %v465, 0.0
      %v508 = vmax.f32 %v468, 0.0
      %v509 = vmax.f32 %v473, 0.0
      %v510 = vmax.f32 %v476, 0.0
      %v511 = vmax.f32 %v481, 0.0
      %v512 = vmax.f32 %v484, 0.0
      %v513 = vpack.c.bf16 %v488, %v487
      %v514 = vpack.c.bf16 %v490, %v489
      %v515 = vpack.c.bf16 %v492, %v491
      %v516 = vpack.c.bf16 %v494, %v493
      %v517 = vpack.c.bf16 %v496, %v495
      %v518 = vpack.c.bf16 %v498, %v497
      %v519 = vpack.c.bf16 %v500, %v499
      %v520 = vpack.c.bf16 %v502, %v501
      %v521 = vpack.c.bf16 %v504, %v503
      %v522 = vpack.c.bf16 %v506, %v505
      %v523 = vpack.c.bf16 %v508, %v507
      %v524 = vpack.c.bf16 %v510, %v509
      %v525 = vpack.c.bf16 %v512, %v511
      %v539 = vunpack.c.l.b16 %v513
      %v540 = vunpack.c.h.b16 %v513
      %v541 = vunpack.c.l.b16 %v514
      %v542 = vunpack.c.h.b16 %v514
      %v543 = vunpack.c.l.b16 %v515
      %v544 = vunpack.c.h.b16 %v515
      %v545 = vunpack.c.l.b16 %v516
      %v546 = vunpack.c.h.b16 %v516
      %v547 = vunpack.c.l.b16 %v517
      %v548 = vunpack.c.h.b16 %v517
      %v549 = vunpack.c.l.b16 %v518
      %v550 = vunpack.c.h.b16 %v518
      %v551 = vunpack.c.l.b16 %v519
      %v552 = vunpack.c.h.b16 %v519
      %v553 = vunpack.c.l.b16 %v520
      %v554 = vunpack.c.h.b16 %v520
      %v555 = vunpack.c.l.b16 %v521
      %v556 = vunpack.c.h.b16 %v521
      %v557 = vunpack.c.l.b16 %v522
      %v558 = vunpack.c.h.b16 %v522
      %v559 = vunpack.c.l.b16 %v523
      %v560 = vunpack.c.h.b16 %v523
      %v561 = vunpack.c.l.b16 %v524
      %v562 = vunpack.c.h.b16 %v524
      %v563 = vunpack.c.l.b16 %v525
      %v564 = vunpack.c.h.b16 %v525
      %v565 = vpack.c.b16 %v539, %v539
      %v566 = vpack.c.b16 %v540, %v540
      %v567 = vpack.c.b16 %v541, %v541
      %v568 = vpack.c.b16 %v542, %v542
      %v569 = vpack.c.b16 %v543, %v543
      %v570 = vpack.c.b16 %v544, %v544
      %v571 = vpack.c.b16 %v545, %v545
      %v572 = vpack.c.b16 %v546, %v546
      %v573 = vpack.c.b16 %v547, %v547
      %v574 = vpack.c.b16 %v548, %v548
      %v575 = vpack.c.b16 %v549, %v549
      %v576 = vpack.c.b16 %v550, %v550
      %v577 = vpack.c.b16 %v551, %v551
      %v578 = vpack.c.b16 %v552, %v552
      %v579 = vpack.c.b16 %v553, %v553
      %v580 = vpack.c.b16 %v554, %v554
      %v581 = vpack.c.b16 %v555, %v555
      %v582 = vpack.c.b16 %v556, %v556
      %v583 = vpack.c.b16 %v557, %v557
      %v584 = vpack.c.b16 %v558, %v558
      %v585 = vpack.c.b16 %v559, %v559
      %v586 = vpack.c.b16 %v560, %v560
      %v587 = vpack.c.b16 %v561, %v561
      %v588 = vpack.c.b16 %v562, %v562
      %v589 = vpack.c.b16 %v563, %v563
      %v590 = vpack.c.b16 %v564, %v564
      %617 = vst [vmem:[%s172] sm:$0xf] %v565
      %618 = vst [vmem:[%s172 + $0x4] sm:$0xf] %v566
      %619 = vst [vmem:[%s172 + $0x8] sm:$0xf] %v567
      %620 = vst [vmem:[%s172 + $0xc] sm:$0xf] %v568
      %621 = vst [vmem:[%s172 + $0x10] sm:$0xf] %v569
      %622 = vst [vmem:[%s172 + $0x14] sm:$0xf] %v570
      %623 = vst [vmem:[%s172 + $0x18] sm:$0xf] %v571
      %624 = vst [vmem:[%s172 + $0x1c] sm:$0xf] %v572
      %625 = vst [vmem:[%s172 + $0x20] sm:$0xf] %v573
      %626 = vst [vmem:[%s172 + $0x24] sm:$0xf] %v574
      %627 = vst [vmem:[%s172 + $0x28] sm:$0xf] %v575
      %628 = vst [vmem:[%s172 + $0x2c] sm:$0xf] %v576
      %629 = vst [vmem:[%s172 + $0x30] sm:$0xf] %v577
      %630 = vst [vmem:[%s172 + $0x34] sm:$0xf] %v578
      %631 = vst [vmem:[%s172 + $0x38] sm:$0xf] %v579
      %632 = vst [vmem:[%s172 + $0x3c] sm:$0xf] %v580
      %633 = vst [vmem:[%s172 + $0x40] sm:$0xf] %v581
      %634 = vst [vmem:[%s172 + $0x44] sm:$0xf] %v582
      %635 = vst [vmem:[%s172 + $0x48] sm:$0xf] %v583
      %636 = vst [vmem:[%s172 + $0x4c] sm:$0xf] %v584
      %637 = vst [vmem:[%s172 + $0x50] sm:$0xf] %v585
      %638 = vst [vmem:[%s172 + $0x54] sm:$0xf] %v586
      %639 = vst [vmem:[%s172 + $0x58] sm:$0xf] %v587
      %640 = vst [vmem:[%s172 + $0x5c] sm:$0xf] %v588
      %641 = vst [vmem:[%s172 + $0x60] sm:$0xf] %v589
      %642 = vst [vmem:[%s172 + $0x64] sm:$0xf] %v590
      %s643 = smul.u32 26, %s14
      %p644 = scmp.lt.s32.totalorder %s643, 51
      %s645 = scalar_select %p644, %s643, 51
      %s646 = smul.addr %s645, 4
      %s647 = scalar_lea.vmem %s3, %s646
      // Predicated region
      $region33: #{dqn_forward.3} parent=31 // pred_check
        %p648 = pneg %p100
      $region34: #{dqn_forward.3} parent=31 // pred_check_branch
        %650 = sbr.rel (%p648) target = $region36
      $region35: #{dqn_forward.3} parent=31 // pred_region
        %s651 = smul.u32 26, %s14
      $region36: #{dqn_forward.3} parent=31 // pred_fallthru
        _
    $region32: #{dqn_forward.3} parent=5 // pred_fallthru
      _
    %p652 = scmp.le.s32.totalorder 2, %s9
    // Predicated region
    $region37: #{dqn_forward.3} parent=5 // pred_check
      %p653 = pneg %p652
    $region38: #{dqn_forward.3} parent=5 // pred_check_branch
      %655 = sbr.rel (%p653) target = $region40
    $region39: #{dqn_forward.3} parent=5 // pred_region
      %s656 = ssub.s32 %s9, 2
      // Predicated region
      $region41: #{dqn_forward.3} parent=39 // pred_check
        %p657 = pneg %p106
      $region42: #{dqn_forward.3} parent=39 // pred_check_branch
        %659 = sbr.rel (%p657) target = $region44
      $region43: #{dqn_forward.3} parent=39 // pred_region
        %s660 = smul.u32 26, %s15
        %p661 = scmp.lt.s32.totalorder %s660, 51
        %s662 = scalar_select %p661, %s660, 51
        %s663 = smul.addr %s662, 4
        %s664 = scalar_lea.vmem %s3, %s663
      $region44: #{dqn_forward.3} parent=39 // pred_fallthru
        _
    $region40: #{dqn_forward.3} parent=5 // pred_fallthru
      _
  $region6: #{dqn_forward.3} parent=0 // loop_footer
    %s13 = sadd.s32 1, %s9
  $region7: #{dqn_forward.3} parent=0 // loop_footer_branch
    %8 = sbr.rel target = $region3
  $region8: #{dqn_forward.3} parent=0 // loop_exit
    _

// kernel: dqn_forward.4
$region0: #{dqn_forward.4}
  #allocation0 [shape = 'u32[]', space=smem, size = 0x4, offset = 0x4, fixed_abs, tag = 'smem constant byte address 0x4 - core index']
  #allocation1 [shape = 'u32[144,128]{1,0:T(1,128)}', space=vmem, size = 0x12000, scoped, tag = 'internal scratch']
  %s0 = inlined_call_operand.vmem [shape: bf16[64,512], index: 0, kind: input, shape index: {}]
  %s1 = inlined_call_operand.vmem [shape: bf16[512,128], index: 1, kind: input, shape index: {}]
  %s2 = inlined_call_operand.vmem [shape: f32[1,128], index: 2, kind: input, shape index: {}]
  %s3 = inlined_call_operand.vmem [shape: bf16[64,128], index: 3, kind: output, shape index: {}]
  %s4 = sld [smem:[#allocation0]]
  $region45: #{dqn_forward.4} parent=0
    _
  %s6 = ssub.s32 1, %s4
  %s7 = scalar_select 0, %s6, %s4
  loop: start=0, step=1, limit=4
  $region2: #{dqn_forward.4} parent=0 // loop_pre_header
    _
  $region3: #{dqn_forward.4} parent=0 // loop_header
    %s9 = sphi 0, %s13
    %p10 = scmp.ge.s32.totalorder %s9, 4
    %s19 = sphi 0, %s21
    %s22 = sphi 0, %s19
    %s23 = sphi 0, %s22
    %s39 = sphi 0, %s23
    %s43 = sphi 0, %s43
    %s45 = sphi 0, %s43
    %s46 = sphi 0, %s45
    %s60 = sphi 0, %s46
    %s64 = sphi 0, %s64
    %s66 = sphi 0, %s64
    %s67 = sphi 0, %s66
    %s81 = sphi 0, %s67
    %s87 = sphi 0, %s89
    %s90 = sphi 0, %s87
    %s91 = sphi 0, %s90
    %s107 = sphi 0, %s91
  $region4: #{dqn_forward.4} parent=0 // loop_header_branch
    %12 = sbr.rel (%p10) target = $region8
  $region5: #{dqn_forward.4} parent=0 // loop_body
    %s14 = ssub.s32 %s9, 1
    %s15 = ssub.s32 %s9, 2
    %s16 = sadd.s32 %s9, 1
    %s17 = ssub.s32 %s9, %s16
    %p18 = scmp.eq.s32.totalorder %s17, 0
    %s20 = sadd.s32 %s19, 1
    %s21 = scalar_select %p18, %s19, %s20
    %p24 = pneg %p18
    %p25 = scmp.eq.s32.totalorder %s9, 1
    %p26 = por %p24, %p25
    %p27 = scmp.ne.s32.totalorder %s19, %s22
    %p28 = scmp.eq.s32.totalorder %s9, 0
    %p29 = por %p27, %p28
    %p30 = scmp.ne.s32.totalorder %s19, %s22
    %p31 = scmp.eq.s32.totalorder %s14, 1
    %p32 = por %p30, %p31
    %p33 = scmp.ne.s32.totalorder %s22, %s23
    %p34 = scmp.eq.s32.totalorder %s14, 0
    %p35 = por %p33, %p34
    %p36 = scmp.ne.s32.totalorder %s22, %s23
    %p37 = scmp.eq.s32.totalorder %s15, 1
    %p38 = por %p36, %p37
    %p40 = scmp.ne.s32.totalorder %s23, %s39
    %p41 = scmp.eq.s32.totalorder %s15, 0
    %p42 = por %p40, %p41
    %s44 = sadd.s32 %s43, 1
    %p47 = scmp.eq.s32.totalorder %s9, 1
    %p48 = scmp.ne.s32.totalorder %s43, %s45
    %p49 = scmp.eq.s32.totalorder %s9, 0
    %p50 = por %p48, %p49
    %p51 = scmp.ne.s32.totalorder %s43, %s45
    %p52 = scmp.eq.s32.totalorder %s14, 1
    %p53 = por %p51, %p52
    %p54 = scmp.ne.s32.totalorder %s45, %s46
    %p55 = scmp.eq.s32.totalorder %s14, 0
    %p56 = por %p54, %p55
    %p57 = scmp.ne.s32.totalorder %s45, %s46
    %p58 = scmp.eq.s32.totalorder %s15, 1
    %p59 = por %p57, %p58
    %p61 = scmp.ne.s32.totalorder %s46, %s60
    %p62 = scmp.eq.s32.totalorder %s15, 0
    %p63 = por %p61, %p62
    %s65 = sadd.s32 %s64, 1
    %p68 = scmp.eq.s32.totalorder %s9, 1
    %p69 = scmp.ne.s32.totalorder %s64, %s66
    %p70 = scmp.eq.s32.totalorder %s9, 0
    %p71 = por %p69, %p70
    %p72 = scmp.ne.s32.totalorder %s64, %s66
    %p73 = scmp.eq.s32.totalorder %s14, 1
    %p74 = por %p72, %p73
    %p75 = scmp.ne.s32.totalorder %s66, %s67
    %p76 = scmp.eq.s32.totalorder %s14, 0
    %p77 = por %p75, %p76
    %p78 = scmp.ne.s32.totalorder %s66, %s67
    %p79 = scmp.eq.s32.totalorder %s15, 1
    %p80 = por %p78, %p79
    %p82 = scmp.ne.s32.totalorder %s67, %s81
    %p83 = scmp.eq.s32.totalorder %s15, 0
    %p84 = por %p82, %p83
    %s85 = ssub.s32 %s9, %s16
    %p86 = scmp.eq.s32.totalorder %s85, 0
    %s88 = sadd.s32 %s87, 1
    %s89 = scalar_select %p86, %s87, %s88
    %p92 = pneg %p86
    %p93 = scmp.eq.s32.totalorder %s9, 1
    %p94 = por %p92, %p93
    %p95 = scmp.ne.s32.totalorder %s87, %s90
    %p96 = scmp.eq.s32.totalorder %s9, 0
    %p97 = por %p95, %p96
    %p98 = scmp.ne.s32.totalorder %s87, %s90
    %p99 = scmp.eq.s32.totalorder %s14, 1
    %p100 = por %p98, %p99
    %p101 = scmp.ne.s32.totalorder %s90, %s91
    %p102 = scmp.eq.s32.totalorder %s14, 0
    %p103 = por %p101, %p102
    %p104 = scmp.ne.s32.totalorder %s90, %s91
    %p105 = scmp.eq.s32.totalorder %s15, 1
    %p106 = por %p104, %p105
    %p108 = scmp.ne.s32.totalorder %s91, %s107
    %p109 = scmp.eq.s32.totalorder %s15, 0
    %p110 = por %p108, %p109
    %p111 = scmp.le.s32.totalorder 1, %s9
    %p112 = scmp.lt.s32.totalorder %s9, 3
    %p113 = pnand %p111, %p112
    %p114 = pneg %p113
    // Predicated region
    $region9: #{dqn_forward.4} parent=5 // pred_check
      _
    $region10: #{dqn_forward.4} parent=5 // pred_check_branch
      %116 = sbr.rel (%p113) target = $region12
    $region11: #{dqn_forward.4} parent=5 // pred_region
      %s117 = ssub.s32 %s9, 1
      // Predicated region
      $region13: #{dqn_forward.4} parent=11 // pred_check
        %p118 = pneg %p56
      $region14: #{dqn_forward.4} parent=11 // pred_check_branch
        %120 = sbr.rel (%p118) target = $region16
      $region15: #{dqn_forward.4} parent=11 // pred_region
        _
      $region16: #{dqn_forward.4} parent=11 // pred_fallthru
        _
      // Predicated region
      $region17: #{dqn_forward.4} parent=11 // pred_check
        %p121 = pneg %p77
      $region18: #{dqn_forward.4} parent=11 // pred_check_branch
        %123 = sbr.rel (%p121) target = $region20
      $region19: #{dqn_forward.4} parent=11 // pred_region
        _
      $region20: #{dqn_forward.4} parent=11 // pred_fallthru
        _
    $region12: #{dqn_forward.4} parent=5 // pred_fallthru
      _
    %p124 = scmp.lt.s32.totalorder %s9, 2
    // Predicated region
    $region21: #{dqn_forward.4} parent=5 // pred_check
      %p125 = pneg %p124
    $region22: #{dqn_forward.4} parent=5 // pred_check_branch
      %127 = sbr.rel (%p125) target = $region24
    $region23: #{dqn_forward.4} parent=5 // pred_region
      // Predicated region
      $region25: #{dqn_forward.4} parent=23 // pred_check
        %p128 = pneg %p29
      $region26: #{dqn_forward.4} parent=23 // pred_check_branch
        %130 = sbr.rel (%p128) target = $region28
      $region27: #{dqn_forward.4} parent=23 // pred_region
        %s131 = smul.u32 4, %s9
        %p132 = scmp.lt.s32.totalorder %s131, 7
        %s133 = scalar_select %p132, %s131, 7
        %s134 = smul.addr %s133, 4
        %s135 = smul.addr %s134, 4
        %s136 = scalar_lea.vmem %s0, %s135
        %s137 = smul.u32 4, %s9
      $region28: #{dqn_forward.4} parent=23 // pred_fallthru
        _
    $region24: #{dqn_forward.4} parent=5 // pred_fallthru
      _
    %p138 = scmp.le.s32.totalorder 1, %s9
    %p139 = scmp.lt.s32.totalorder %s9, 3
    %p140 = pnand %p138, %p139
    %p141 = pneg %p140
    // Predicated region
    $region29: #{dqn_forward.4} parent=5 // pred_check
      _
    $region30: #{dqn_forward.4} parent=5 // pred_check_branch
      %143 = sbr.rel (%p140) target = $region32
    $region31: #{dqn_forward.4} parent=5 // pred_region
      %s144 = ssub.s32 %s9, 1
      %s145 = smul.u32 4, %s14
      %p146 = scmp.lt.s32.totalorder %s145, 7
      %s147 = scalar_select %p146, %s145, 7
      %s148 = smul.addr %s147, 4
      %s149 = smul.addr %s148, 4
      %s150 = scalar_lea.vmem %s0, %s149
      %p151 = pneg %p35
      %p152 = pneg %p32
      %p153 = pneg %p56
      %p154 = pneg %p53
      %p155 = pneg %p77
      %p156 = pneg %p74
      %p157 = pneg %p103
      %p158 = pneg %p100
      %s159 = smul.u32 4, %s14
      %p160 = scmp.lt.s32.totalorder %s159, 7
      %s161 = scalar_select %p160, %s159, 7
      %s162 = smul.addr %s161, 4
      %s163 = scalar_lea.vmem %s3, %s162
      %s164 = smul.u32 4, %s14
      %p165 = scmp.lt.s32.totalorder %s164, 7
      %s166 = scalar_select %p165, %s164, 7
      %s167 = smul.addr %s166, 4
      %s168 = smul.addr %s167, 4
      %s169 = scalar_lea.vmem %s0, %s168
      %s170 = smul.u32 4, %s14
      %s171 = smul.u32 4, %s14
      %p172 = scmp.lt.s32.totalorder %s171, 7
      %s173 = scalar_select %p172, %s171, 7
      %s174 = smul.addr %s173, 4
      %s175 = scalar_lea.vmem %s3, %s174
      %s176 = smul.u32 4, %s14
      %v178 = vld [vmem:[%s169] sm:$0xff]
      %v179 = vld [vmem:[%s169 + $0x8] sm:$0xff]
      %v180 = vld [vmem:[%s169 + $0x10] sm:$0xff]
      %v181 = vld [vmem:[%s169 + $0x18] sm:$0xff]
      %v182 = vld [vmem:[%s169 + $0x20] sm:$0xff]
      %v183 = vld [vmem:[%s169 + $0x28] sm:$0xff]
      %v184 = vld [vmem:[%s169 + $0x30] sm:$0xff]
      %v185 = vld [vmem:[%s169 + $0x38] sm:$0xff]
      %v186 = vld [vmem:[%s1] sm:$0xf]
      %v187 = vld [vmem:[%s1 + $0x4] sm:$0xf]
      %v188 = vld [vmem:[%s1 + $0x8] sm:$0xf]
      %v189 = vld [vmem:[%s1 + $0xc] sm:$0xf]
      %v190 = vld [vmem:[%s1 + $0x10] sm:$0xf]
      %v191 = vld [vmem:[%s1 + $0x14] sm:$0xf]
      %v192 = vld [vmem:[%s1 + $0x18] sm:$0xf]
      %v193 = vld [vmem:[%s1 + $0x1c] sm:$0xf]
      %v194 = vld [vmem:[%s1 + $0x20] sm:$0xf]
      %v195 = vld [vmem:[%s1 + $0x24] sm:$0xf]
      %v196 = vld [vmem:[%s1 + $0x28] sm:$0xf]
      %v197 = vld [vmem:[%s1 + $0x2c] sm:$0xf]
      %v198 = vld [vmem:[%s1 + $0x30] sm:$0xf]
      %v199 = vld [vmem:[%s1 + $0x34] sm:$0xf]
      %v200 = vld [vmem:[%s1 + $0x38] sm:$0xf]
      %v201 = vld [vmem:[%s1 + $0x3c] sm:$0xf]
      %v202 = vld [vmem:[%s1 + $0x40] sm:$0xf]
      %v203 = vld [vmem:[%s1 + $0x44] sm:$0xf]
      %v204 = vld [vmem:[%s1 + $0x48] sm:$0xf]
      %v205 = vld [vmem:[%s1 + $0x4c] sm:$0xf]
      %v206 = vld [vmem:[%s1 + $0x50] sm:$0xf]
      %v207 = vld [vmem:[%s1 + $0x54] sm:$0xf]
      %v208 = vld [vmem:[%s1 + $0x58] sm:$0xf]
      %v209 = vld [vmem:[%s1 + $0x5c] sm:$0xf]
      %v210 = vld [vmem:[%s1 + $0x60] sm:$0xf]
      %v211 = vld [vmem:[%s1 + $0x64] sm:$0xf]
      %v212 = vld [vmem:[%s1 + $0x68] sm:$0xf]
      %v213 = vld [vmem:[%s1 + $0x6c] sm:$0xf]
      %v214 = vld [vmem:[%s1 + $0x70] sm:$0xf]
      %v215 = vld [vmem:[%s1 + $0x74] sm:$0xf]
      %v216 = vld [vmem:[%s1 + $0x78] sm:$0xf]
      %v217 = vld [vmem:[%s1 + $0x7c] sm:$0xf]
      %v218 = vld [vmem:[%s1 + $0x80] sm:$0xf]
      %v219 = vld [vmem:[%s1 + $0x84] sm:$0xf]
      %v220 = vld [vmem:[%s1 + $0x88] sm:$0xf]
      %v221 = vld [vmem:[%s1 + $0x8c] sm:$0xf]
      %v222 = vld [vmem:[%s1 + $0x90] sm:$0xf]
      %v223 = vld [vmem:[%s1 + $0x94] sm:$0xf]
      %v224 = vld [vmem:[%s1 + $0x98] sm:$0xf]
      %v225 = vld [vmem:[%s1 + $0x9c] sm:$0xf]
      %v226 = vld [vmem:[%s1 + $0xa0] sm:$0xf]
      %v227 = vld [vmem:[%s1 + $0xa4] sm:$0xf]
      %v228 = vld [vmem:[%s1 + $0xa8] sm:$0xf]
      %v229 = vld [vmem:[%s1 + $0xac] sm:$0xf]
      %v230 = vld [vmem:[%s1 + $0xb0] sm:$0xf]
      %v231 = vld [vmem:[%s1 + $0xb4] sm:$0xf]
      %v232 = vld [vmem:[%s1 + $0xb8] sm:$0xf]
      %v233 = vld [vmem:[%s1 + $0xbc] sm:$0xf]
      %v234 = vld [vmem:[%s1 + $0xc0] sm:$0xf]
      %v235 = vld [vmem:[%s1 + $0xc4] sm:$0xf]
      %v236 = vld [vmem:[%s1 + $0xc8] sm:$0xf]
      %v237 = vld [vmem:[%s1 + $0xcc] sm:$0xf]
      %v238 = vld [vmem:[%s1 + $0xd0] sm:$0xf]
      %v239 = vld [vmem:[%s1 + $0xd4] sm:$0xf]
      %v240 = vld [vmem:[%s1 + $0xd8] sm:$0xf]
      %v241 = vld [vmem:[%s1 + $0xdc] sm:$0xf]
      %v242 = vld [vmem:[%s1 + $0xe0] sm:$0xf]
      %v243 = vld [vmem:[%s1 + $0xe4] sm:$0xf]
      %v244 = vld [vmem:[%s1 + $0xe8] sm:$0xf]
      %v245 = vld [vmem:[%s1 + $0xec] sm:$0xf]
      %v246 = vld [vmem:[%s1 + $0xf0] sm:$0xf]
      %v247 = vld [vmem:[%s1 + $0xf4] sm:$0xf]
      %v248 = vld [vmem:[%s1 + $0xf8] sm:$0xf]
      %v249 = vld [vmem:[%s1 + $0xfc] sm:$0xf]
      %v250 = vld [vmem:[%s2] sm:$0x1]
      %v252 = vlaneseq
      %v253 = vshrl.u32 %v252, 7
      %v254 = vsub.s32 0, %v253
      %v255 = vrot.slane %v250, %v254
      %v265 = vunpack.c.l.b16 %v178
      %v266 = vunpack.c.h.b16 %v178
      %v267 = vunpack.c.l.b16 %v179
      %v268 = vunpack.c.h.b16 %v179
      %v269 = vunpack.c.l.b16 %v180
      %v270 = vunpack.c.h.b16 %v180
      %v271 = vunpack.c.l.b16 %v181
      %v272 = vunpack.c.h.b16 %v181
      %v273 = vunpack.c.l.b16 %v182
      %v274 = vunpack.c.h.b16 %v182
      %v275 = vunpack.c.l.b16 %v183
      %v276 = vunpack.c.h.b16 %v183
      %v277 = vunpack.c.l.b16 %v184
      %v278 = vunpack.c.h.b16 %v184
      %v279 = vunpack.c.l.b16 %v185
      %v280 = vunpack.c.h.b16 %v185
      %v281 = vpack.c.b16 %v269, %v265
      %v282 = vpack.c.b16 %v270, %v266
      %v283 = vpack.c.b16 %v271, %v267
      %v284 = vpack.c.b16 %v272, %v268
      %v285 = vpack.c.b16 %v277, %v273
      %v286 = vpack.c.b16 %v278, %v274
      %v287 = vpack.c.b16 %v279, %v275
      %v288 = vpack.c.b16 %v280, %v276
      %v361 = vunpack.c.l.b16 %v186
      %v362 = vunpack.c.l.b16 %v187
      %v363 = vunpack.c.l.b16 %v188
      %v364 = vunpack.c.l.b16 %v189
      %v365 = vunpack.c.l.b16 %v190
      %v366 = vunpack.c.l.b16 %v191
      %v367 = vunpack.c.l.b16 %v192
      %v368 = vunpack.c.l.b16 %v193
      %v369 = vunpack.c.l.b16 %v194
      %v370 = vunpack.c.l.b16 %v195
      %v371 = vunpack.c.l.b16 %v196
      %v372 = vunpack.c.l.b16 %v197
      %v373 = vunpack.c.l.b16 %v198
      %v374 = vunpack.c.l.b16 %v199
      %v375 = vunpack.c.l.b16 %v200
      %v376 = vunpack.c.l.b16 %v201
      %v377 = vunpack.c.l.b16 %v202
      %v378 = vunpack.c.l.b16 %v203
      %v379 = vunpack.c.l.b16 %v204
      %v380 = vunpack.c.l.b16 %v205
      %v381 = vunpack.c.l.b16 %v206
      %v382 = vunpack.c.l.b16 %v207
      %v383 = vunpack.c.l.b16 %v208
      %v384 = vunpack.c.l.b16 %v209
      %v385 = vunpack.c.l.b16 %v210
      %v386 = vunpack.c.l.b16 %v211
      %v387 = vunpack.c.l.b16 %v212
      %v388 = vunpack.c.l.b16 %v213
      %v389 = vunpack.c.l.b16 %v214
      %v390 = vunpack.c.l.b16 %v215
      %v391 = vunpack.c.l.b16 %v216
      %v392 = vunpack.c.l.b16 %v217
      %v393 = vunpack.c.l.b16 %v218
      %v394 = vunpack.c.l.b16 %v219
      %v395 = vunpack.c.l.b16 %v220
      %v396 = vunpack.c.l.b16 %v221
      %v397 = vunpack.c.l.b16 %v222
      %v398 = vunpack.c.l.b16 %v223
      %v399 = vunpack.c.l.b16 %v224
      %v400 = vunpack.c.l.b16 %v225
      %v401 = vunpack.c.l.b16 %v226
      %v402 = vunpack.c.l.b16 %v227
      %v403 = vunpack.c.l.b16 %v228
      %v404 = vunpack.c.l.b16 %v229
      %v405 = vunpack.c.l.b16 %v230
      %v406 = vunpack.c.l.b16 %v231
      %v407 = vunpack.c.l.b16 %v232
      %v408 = vunpack.c.l.b16 %v233
      %v409 = vunpack.c.l.b16 %v234
      %v410 = vunpack.c.l.b16 %v235
      %v411 = vunpack.c.l.b16 %v236
      %v412 = vunpack.c.l.b16 %v237
      %v413 = vunpack.c.l.b16 %v238
      %v414 = vunpack.c.l.b16 %v239
      %v415 = vunpack.c.l.b16 %v240
      %v416 = vunpack.c.l.b16 %v241
      %v417 = vunpack.c.l.b16 %v242
      %v418 = vunpack.c.l.b16 %v243
      %v419 = vunpack.c.l.b16 %v244
      %v420 = vunpack.c.l.b16 %v245
      %v421 = vunpack.c.l.b16 %v246
      %v422 = vunpack.c.l.b16 %v247
      %v423 = vunpack.c.l.b16 %v248
      %v424 = vunpack.c.l.b16 %v249
      %v425 = vpack.c.b16 %v362, %v361
      %v426 = vpack.c.b16 %v364, %v363
      %v427 = vpack.c.b16 %v366, %v365
      %v428 = vpack.c.b16 %v368, %v367
      %v429 = vpack.c.b16 %v370, %v369
      %v430 = vpack.c.b16 %v372, %v371
      %v431 = vpack.c.b16 %v374, %v373
      %v432 = vpack.c.b16 %v376, %v375
      %v433 = vpack.c.b16 %v378, %v377
      %v434 = vpack.c.b16 %v380, %v379
      %v435 = vpack.c.b16 %v382, %v381
      %v436 = vpack.c.b16 %v384, %v383
      %v437 = vpack.c.b16 %v386, %v385
      %v438 = vpack.c.b16 %v388, %v387
      %v439 = vpack.c.b16 %v390, %v389
      %v440 = vpack.c.b16 %v392, %v391
      %v441 = vpack.c.b16 %v394, %v393
      %v442 = vpack.c.b16 %v396, %v395
      %v443 = vpack.c.b16 %v398, %v397
      %v444 = vpack.c.b16 %v400, %v399
      %v445 = vpack.c.b16 %v402, %v401
      %v446 = vpack.c.b16 %v404, %v403
      %v447 = vpack.c.b16 %v406, %v405
      %v448 = vpack.c.b16 %v408, %v407
      %v449 = vpack.c.b16 %v410, %v409
      %v450 = vpack.c.b16 %v412, %v411
      %v451 = vpack.c.b16 %v414, %v413
      %v452 = vpack.c.b16 %v416, %v415
      %v453 = vpack.c.b16 %v418, %v417
      %v454 = vpack.c.b16 %v420, %v419
      %v455 = vpack.c.b16 %v422, %v421
      %v456 = vpack.c.b16 %v424, %v423
      %489 = vmatprep.subr.bf16.mxu0 0
      %490 = vmatpush1.bf16.msra.mxu0 %v432
      %491 = vmatprep.subr.bf16.mxu0 0
      %492 = vmatpush1.bf16.msra.mxu0 %v431
      %493 = vmatprep.subr.bf16.mxu0 0
      %494 = vmatpush1.bf16.msra.mxu0 %v430
      %495 = vmatprep.subr.bf16.mxu0 0
      %496 = vmatpush1.bf16.msra.mxu0 %v429
      %497 = vmatprep.subr.bf16.mxu0 0
      %498 = vmatpush1.bf16.msra.mxu0 %v428
      %499 = vmatprep.subr.bf16.mxu0 0
      %500 = vmatpush1.bf16.msra.mxu0 %v427
      %501 = vmatprep.subr.bf16.mxu0 0
      %502 = vmatpush1.bf16.msra.mxu0 %v426
      %503 = vmatprep.subr.bf16.mxu0 0
      %504 = vmatpush1.bf16.msra.mxu0 %v425
      %505 = vmatprep.subr.bf16.mxu0 0
      %506 = vmatpush2.bf16.msra.mxu0 %v440
      %507 = vmatprep.subr.bf16.mxu0 0
      %508 = vmatpush2.bf16.msra.mxu0 %v439
      %509 = vmatprep.subr.bf16.mxu0 0
      %510 = vmatpush2.bf16.msra.mxu0 %v438
      %511 = vmatprep.subr.bf16.mxu0 0
      %512 = vmatpush2.bf16.msra.mxu0 %v437
      %513 = vmatprep.subr.bf16.mxu0 0
      %514 = vmatpush2.bf16.msra.mxu0 %v436
      %515 = vmatprep.subr.bf16.mxu0 0
      %516 = vmatpush2.bf16.msra.mxu0 %v435
      %517 = vmatprep.subr.bf16.mxu0 0
      %518 = vmatpush2.bf16.msra.mxu0 %v434
      %519 = vmatprep.subr.bf16.mxu0 0
      %520 = vmatpush2.bf16.msra.mxu0 %v433
      %521 = vmatprep.mubr.bf16.mxu0 %v282
      %522 = vmatmul.mubr.bf16.gmra.mxu0 %v281
      %v523 = vpop.f32.mrf.mxu0
      %v524 = vadd.f32 %v255, %v523
      %v525 = vpop.f32.mrf.mxu0
      %v526 = vpop.f32.mrf.mxu0
      %v527 = vadd.f32 %v255, %v526
      %v528 = vpop.f32.mrf.mxu0
      %529 = vmatprep.mubr.bf16.mxu0 %v286
      %530 = vmatmul.mubr.bf16.gmra.mxu0 %v285
      %v531 = vpop.f32.mrf.mxu0
      %v532 = vadd.f32 %v255, %v531
      %v533 = vpop.f32.mrf.mxu0
      %v534 = vpop.f32.mrf.mxu0
      %v535 = vadd.f32 %v255, %v534
      %v536 = vpop.f32.mrf.mxu0
      %537 = vdwg.mxu0
      %538 = vmatprep.subr.bf16.mxu0 0
      %539 = vmatpush1.bf16.msra.mxu0 %v448
      %540 = vmatprep.subr.bf16.mxu0 0
      %541 = vmatpush1.bf16.msra.mxu0 %v447
      %542 = vmatprep.subr.bf16.mxu0 0
      %543 = vmatpush1.bf16.msra.mxu0 %v446
      %544 = vmatprep.subr.bf16.mxu0 0
      %545 = vmatpush1.bf16.msra.mxu0 %v445
      %546 = vmatprep.subr.bf16.mxu0 0
      %547 = vmatpush1.bf16.msra.mxu0 %v444
      %548 = vmatprep.subr.bf16.mxu0 0
      %549 = vmatpush1.bf16.msra.mxu0 %v443
      %550 = vmatprep.subr.bf16.mxu0 0
      %551 = vmatpush1.bf16.msra.mxu0 %v442
      %552 = vmatprep.subr.bf16.mxu0 0
      %553 = vmatpush1.bf16.msra.mxu0 %v441
      %554 = vmatprep.subr.bf16.mxu0 0
      %555 = vmatpush2.bf16.msra.mxu0 %v456
      %556 = vmatprep.subr.bf16.mxu0 0
      %557 = vmatpush2.bf16.msra.mxu0 %v455
      %558 = vmatprep.subr.bf16.mxu0 0
      %559 = vmatpush2.bf16.msra.mxu0 %v454
      %560 = vmatprep.subr.bf16.mxu0 0
      %561 = vmatpush2.bf16.msra.mxu0 %v453
      %562 = vmatprep.subr.bf16.mxu0 0
      %563 = vmatpush2.bf16.msra.mxu0 %v452
      %564 = vmatprep.subr.bf16.mxu0 0
      %565 = vmatpush2.bf16.msra.mxu0 %v451
      %566 = vmatprep.subr.bf16.mxu0 0
      %567 = vmatpush2.bf16.msra.mxu0 %v450
      %568 = vmatprep.subr.bf16.mxu0 0
      %569 = vmatpush2.bf16.msra.mxu0 %v449
      %570 = vmatprep.mubr.bf16.mxu0 %v284
      %571 = vmatmul.mubr.bf16.gmra.mxu0 %v283
      %v572 = vpop.f32.mrf.mxu0
      %v573 = vadd.f32 %v524, %v572
      %v574 = vpop.f32.mrf.mxu0
      %v575 = vpop.f32.mrf.mxu0
      %v576 = vadd.f32 %v527, %v575
      %v577 = vpop.f32.mrf.mxu0
      %578 = vmatprep.mubr.bf16.mxu0 %v288
      %579 = vmatmul.mubr.bf16.gmra.mxu0 %v287
      %v580 = vpop.f32.mrf.mxu0
      %v581 = vadd.f32 %v532, %v580
      %v582 = vpop.f32.mrf.mxu0
      %v583 = vpop.f32.mrf.mxu0
      %v584 = vadd.f32 %v535, %v583
      %v585 = vpop.f32.mrf.mxu0
      %586 = vdwg.mxu0
      %v587 = vmax.f32 %v573, 0.0
      %v588 = vmax.f32 %v576, 0.0
      %v589 = vmax.f32 %v581, 0.0
      %v590 = vmax.f32 %v584, 0.0
      %v591 = vpack.c.bf16 %v588, %v587
      %v592 = vpack.c.bf16 %v590, %v589
      %v595 = vunpack.c.l.b16 %v591
      %v596 = vunpack.c.h.b16 %v591
      %v597 = vunpack.c.l.b16 %v592
      %v598 = vunpack.c.h.b16 %v592
      %v599 = vpack.c.b16 %v595, %v595
      %v600 = vpack.c.b16 %v596, %v596
      %v601 = vpack.c.b16 %v597, %v597
      %v602 = vpack.c.b16 %v598, %v598
      %607 = vst [vmem:[%s175] sm:$0xf] %v599
      %608 = vst [vmem:[%s175 + $0x4] sm:$0xf] %v600
      %609 = vst [vmem:[%s175 + $0x8] sm:$0xf] %v601
      %610 = vst [vmem:[%s175 + $0xc] sm:$0xf] %v602
      %s611 = smul.u32 4, %s14
      %p612 = scmp.lt.s32.totalorder %s611, 7
      %s613 = scalar_select %p612, %s611, 7
      %s614 = smul.addr %s613, 4
      %s615 = scalar_lea.vmem %s3, %s614
      // Predicated region
      $region33: #{dqn_forward.4} parent=31 // pred_check
        %p616 = pneg %p100
      $region34: #{dqn_forward.4} parent=31 // pred_check_branch
        %618 = sbr.rel (%p616) target = $region36
      $region35: #{dqn_forward.4} parent=31 // pred_region
        %s619 = smul.u32 4, %s14
      $region36: #{dqn_forward.4} parent=31 // pred_fallthru
        _
    $region32: #{dqn_forward.4} parent=5 // pred_fallthru
      _
    %p620 = scmp.le.s32.totalorder 2, %s9
    // Predicated region
    $region37: #{dqn_forward.4} parent=5 // pred_check
      %p621 = pneg %p620
    $region38: #{dqn_forward.4} parent=5 // pred_check_branch
      %623 = sbr.rel (%p621) target = $region40
    $region39: #{dqn_forward.4} parent=5 // pred_region
      %s624 = ssub.s32 %s9, 2
      // Predicated region
      $region41: #{dqn_forward.4} parent=39 // pred_check
        %p625 = pneg %p106
      $region42: #{dqn_forward.4} parent=39 // pred_check_branch
        %627 = sbr.rel (%p625) target = $region44
      $region43: #{dqn_forward.4} parent=39 // pred_region
        %s628 = smul.u32 4, %s15
        %p629 = scmp.lt.s32.totalorder %s628, 7
        %s630 = scalar_select %p629, %s628, 7
        %s631 = smul.addr %s630, 4
        %s632 = scalar_lea.vmem %s3, %s631
      $region44: #{dqn_forward.4} parent=39 // pred_fallthru
        _
    $region40: #{dqn_forward.4} parent=5 // pred_fallthru
      _
  $region6: #{dqn_forward.4} parent=0 // loop_footer
    %s13 = sadd.s32 1, %s9
  $region7: #{dqn_forward.4} parent=0 // loop_footer_branch
    %8 = sbr.rel target = $region3
  $region8: #{dqn_forward.4} parent=0 // loop_exit
    _

// kernel: dqn_forward.5
$region0: #{dqn_forward.5}
  #allocation0 [shape = 'u32[]', space=smem, size = 0x4, offset = 0x4, fixed_abs, tag = 'smem constant byte address 0x4 - core index']
  #allocation1 [shape = 'u32[144,128]{1,0:T(1,128)}', space=vmem, size = 0x12000, scoped, tag = 'internal scratch']
  %s0 = inlined_call_operand.vmem [shape: bf16[16,896], index: 0, kind: input, shape index: {}]
  %s1 = inlined_call_operand.vmem [shape: bf16[896,128], index: 1, kind: input, shape index: {}]
  %s2 = inlined_call_operand.vmem [shape: f32[1,128], index: 2, kind: input, shape index: {}]
  %s3 = inlined_call_operand.vmem [shape: bf16[1,128,128], index: 3, kind: input, shape index: {}]
  %s4 = inlined_call_operand.vmem [shape: f32[1,128], index: 4, kind: input, shape index: {}]
  %s5 = inlined_call_operand.vmem [shape: f32[16,128], index: 5, kind: output, shape index: {}]
  %s6 = sld [smem:[#allocation0]]
  $region30: #{dqn_forward.5} parent=0
    _
  %s8 = ssub.s32 1, %s6
  %s9 = scalar_select 0, %s8, %s6
  // Predicated region
  $region2: #{dqn_forward.5} parent=0 // pred_check
    _
  $region3: #{dqn_forward.5} parent=0 // pred_check_branch
    %11 = sbr.rel (0) target = $region5
  $region4: #{dqn_forward.5} parent=0 // pred_region
    _
  $region5: #{dqn_forward.5} parent=0 // pred_fallthru
    _
  // Predicated region
  $region6: #{dqn_forward.5} parent=0 // pred_check
    _
  $region7: #{dqn_forward.5} parent=0 // pred_check_branch
    %13 = sbr.rel (0) target = $region9
  $region8: #{dqn_forward.5} parent=0 // pred_region
    _
  $region9: #{dqn_forward.5} parent=0 // pred_fallthru
    _
  // Predicated region
  $region10: #{dqn_forward.5} parent=0 // pred_check
    _
  $region11: #{dqn_forward.5} parent=0 // pred_check_branch
    %15 = sbr.rel (0) target = $region13
  $region12: #{dqn_forward.5} parent=0 // pred_region
    _
  $region13: #{dqn_forward.5} parent=0 // pred_fallthru
    _
  // Predicated region
  $region14: #{dqn_forward.5} parent=0 // pred_check
    _
  $region15: #{dqn_forward.5} parent=0 // pred_check_branch
    %17 = sbr.rel (0) target = $region17
  $region16: #{dqn_forward.5} parent=0 // pred_region
    _
  $region17: #{dqn_forward.5} parent=0 // pred_fallthru
    _
  // Predicated region
  $region18: #{dqn_forward.5} parent=0 // pred_check
    _
  $region19: #{dqn_forward.5} parent=0 // pred_check_branch
    %19 = sbr.rel (0) target = $region21
  $region20: #{dqn_forward.5} parent=0 // pred_region
    _
  $region21: #{dqn_forward.5} parent=0 // pred_fallthru
    _
  %v21 = vld [vmem:[%s0] sm:$0xff]
  %v22 = vld [vmem:[%s0 + $0x8] sm:$0xff]
  %v23 = vld [vmem:[%s0 + $0x10] sm:$0xff]
  %v24 = vld [vmem:[%s0 + $0x18] sm:$0xf]
  %v25 = vld [vmem:[%s0 + $0x1c] sm:$0xff]
  %v26 = vld [vmem:[%s0 + $0x24] sm:$0xff]
  %v27 = vld [vmem:[%s0 + $0x2c] sm:$0xff]
  %v28 = vld [vmem:[%s0 + $0x34] sm:$0xf]
  %v29 = vld [vmem:[%s1] sm:$0xf]
  %v30 = vld [vmem:[%s1 + $0x4] sm:$0xf]
  %v31 = vld [vmem:[%s1 + $0x8] sm:$0xf]
  %v32 = vld [vmem:[%s1 + $0xc] sm:$0xf]
  %v33 = vld [vmem:[%s1 + $0x10] sm:$0xf]
  %v34 = vld [vmem:[%s1 + $0x14] sm:$0xf]
  %v35 = vld [vmem:[%s1 + $0x18] sm:$0xf]
  %v36 = vld [vmem:[%s1 + $0x1c] sm:$0xf]
  %v37 = vld [vmem:[%s1 + $0x20] sm:$0xf]
  %v38 = vld [vmem:[%s1 + $0x24] sm:$0xf]
  %v39 = vld [vmem:[%s1 + $0x28] sm:$0xf]
  %v40 = vld [vmem:[%s1 + $0x2c] sm:$0xf]
  %v41 = vld [vmem:[%s1 + $0x30] sm:$0xf]
  %v42 = vld [vmem:[%s1 + $0x34] sm:$0xf]
  %v43 = vld [vmem:[%s1 + $0x38] sm:$0xf]
  %v44 = vld [vmem:[%s1 + $0x3c] sm:$0xf]
  %v45 = vld [vmem:[%s1 + $0x40] sm:$0xf]
  %v46 = vld [vmem:[%s1 + $0x44] sm:$0xf]
  %v47 = vld [vmem:[%s1 + $0x48] sm:$0xf]
  %v48 = vld [vmem:[%s1 + $0x4c] sm:$0xf]
  %v49 = vld [vmem:[%s1 + $0x50] sm:$0xf]
  %v50 = vld [vmem:[%s1 + $0x54] sm:$0xf]
  %v51 = vld [vmem:[%s1 + $0x58] sm:$0xf]
  %v52 = vld [vmem:[%s1 + $0x5c] sm:$0xf]
  %v53 = vld [vmem:[%s1 + $0x60] sm:$0xf]
  %v54 = vld [vmem:[%s1 + $0x64] sm:$0xf]
  %v55 = vld [vmem:[%s1 + $0x68] sm:$0xf]
  %v56 = vld [vmem:[%s1 + $0x6c] sm:$0xf]
  %v57 = vld [vmem:[%s1 + $0x70] sm:$0xf]
  %v58 = vld [vmem:[%s1 + $0x74] sm:$0xf]
  %v59 = vld [vmem:[%s1 + $0x78] sm:$0xf]
  %v60 = vld [vmem:[%s1 + $0x7c] sm:$0xf]
  %v61 = vld [vmem:[%s1 + $0x80] sm:$0xf]
  %v62 = vld [vmem:[%s1 + $0x84] sm:$0xf]
  %v63 = vld [vmem:[%s1 + $0x88] sm:$0xf]
  %v64 = vld [vmem:[%s1 + $0x8c] sm:$0xf]
  %v65 = vld [vmem:[%s1 + $0x90] sm:$0xf]
  %v66 = vld [vmem:[%s1 + $0x94] sm:$0xf]
  %v67 = vld [vmem:[%s1 + $0x98] sm:$0xf]
  %v68 = vld [vmem:[%s1 + $0x9c] sm:$0xf]
  %v69 = vld [vmem:[%s1 + $0xa0] sm:$0xf]
  %v70 = vld [vmem:[%s1 + $0xa4] sm:$0xf]
  %v71 = vld [vmem:[%s1 + $0xa8] sm:$0xf]
  %v72 = vld [vmem:[%s1 + $0xac] sm:$0xf]
  %v73 = vld [vmem:[%s1 + $0xb0] sm:$0xf]
  %v74 = vld [vmem:[%s1 + $0xb4] sm:$0xf]
  %v75 = vld [vmem:[%s1 + $0xb8] sm:$0xf]
  %v76 = vld [vmem:[%s1 + $0xbc] sm:$0xf]
  %v77 = vld [vmem:[%s1 + $0xc0] sm:$0xf]
  %v78 = vld [vmem:[%s1 + $0xc4] sm:$0xf]
  %v79 = vld [vmem:[%s1 + $0xc8] sm:$0xf]
  %v80 = vld [vmem:[%s1 + $0xcc] sm:$0xf]
  %v81 = vld [vmem:[%s1 + $0xd0] sm:$0xf]
  %v82 = vld [vmem:[%s1 + $0xd4] sm:$0xf]
  %v83 = vld [vmem:[%s1 + $0xd8] sm:$0xf]
  %v84 = vld [vmem:[%s1 + $0xdc] sm:$0xf]
  %v85 = vld [vmem:[%s1 + $0xe0] sm:$0xf]
  %v86 = vld [vmem:[%s1 + $0xe4] sm:$0xf]
  %v87 = vld [vmem:[%s1 + $0xe8] sm:$0xf]
  %v88 = vld [vmem:[%s1 + $0xec] sm:$0xf]
  %v89 = vld [vmem:[%s1 + $0xf0] sm:$0xf]
  %v90 = vld [vmem:[%s1 + $0xf4] sm:$0xf]
  %v91 = vld [vmem:[%s1 + $0xf8] sm:$0xf]
  %v92 = vld [vmem:[%s1 + $0xfc] sm:$0xf]
  %v93 = vld [vmem:[%s1 + $0x100] sm:$0xf]
  %v94 = vld [vmem:[%s1 + $0x104] sm:$0xf]
  %v95 = vld [vmem:[%s1 + $0x108] sm:$0xf]
  %v96 = vld [vmem:[%s1 + $0x10c] sm:$0xf]
  %v97 = vld [vmem:[%s1 + $0x110] sm:$0xf]
  %v98 = vld [vmem:[%s1 + $0x114] sm:$0xf]
  %v99 = vld [vmem:[%s1 + $0x118] sm:$0xf]
  %v100 = vld [vmem:[%s1 + $0x11c] sm:$0xf]
  %v101 = vld [vmem:[%s1 + $0x120] sm:$0xf]
  %v102 = vld [vmem:[%s1 + $0x124] sm:$0xf]
  %v103 = vld [vmem:[%s1 + $0x128] sm:$0xf]
  %v104 = vld [vmem:[%s1 + $0x12c] sm:$0xf]
  %v105 = vld [vmem:[%s1 + $0x130] sm:$0xf]
  %v106 = vld [vmem:[%s1 + $0x134] sm:$0xf]
  %v107 = vld [vmem:[%s1 + $0x138] sm:$0xf]
  %v108 = vld [vmem:[%s1 + $0x13c] sm:$0xf]
  %v109 = vld [vmem:[%s1 + $0x140] sm:$0xf]
  %v110 = vld [vmem:[%s1 + $0x144] sm:$0xf]
  %v111 = vld [vmem:[%s1 + $0x148] sm:$0xf]
  %v112 = vld [vmem:[%s1 + $0x14c] sm:$0xf]
  %v113 = vld [vmem:[%s1 + $0x150] sm:$0xf]
  %v114 = vld [vmem:[%s1 + $0x154] sm:$0xf]
  %v115 = vld [vmem:[%s1 + $0x158] sm:$0xf]
  %v116 = vld [vmem:[%s1 + $0x15c] sm:$0xf]
  %v117 = vld [vmem:[%s1 + $0x160] sm:$0xf]
  %v118 = vld [vmem:[%s1 + $0x164] sm:$0xf]
  %v119 = vld [vmem:[%s1 + $0x168] sm:$0xf]
  %v120 = vld [vmem:[%s1 + $0x16c] sm:$0xf]
  %v121 = vld [vmem:[%s1 + $0x170] sm:$0xf]
  %v122 = vld [vmem:[%s1 + $0x174] sm:$0xf]
  %v123 = vld [vmem:[%s1 + $0x178] sm:$0xf]
  %v124 = vld [vmem:[%s1 + $0x17c] sm:$0xf]
  %v125 = vld [vmem:[%s1 + $0x180] sm:$0xf]
  %v126 = vld [vmem:[%s1 + $0x184] sm:$0xf]
  %v127 = vld [vmem:[%s1 + $0x188] sm:$0xf]
  %v128 = vld [vmem:[%s1 + $0x18c] sm:$0xf]
  %v129 = vld [vmem:[%s1 + $0x190] sm:$0xf]
  %v130 = vld [vmem:[%s1 + $0x194] sm:$0xf]
  %v131 = vld [vmem:[%s1 + $0x198] sm:$0xf]
  %v132 = vld [vmem:[%s1 + $0x19c] sm:$0xf]
  %v133 = vld [vmem:[%s1 + $0x1a0] sm:$0xf]
  %v134 = vld [vmem:[%s1 + $0x1a4] sm:$0xf]
  %v135 = vld [vmem:[%s1 + $0x1a8] sm:$0xf]
  %v136 = vld [vmem:[%s1 + $0x1ac] sm:$0xf]
  %v137 = vld [vmem:[%s1 + $0x1b0] sm:$0xf]
  %v138 = vld [vmem:[%s1 + $0x1b4] sm:$0xf]
  %v139 = vld [vmem:[%s1 + $0x1b8] sm:$0xf]
  %v140 = vld [vmem:[%s1 + $0x1bc] sm:$0xf]
  %v141 = vld [vmem:[%s2] sm:$0x1]
  %v143 = vlaneseq
  %v144 = vshrl.u32 %v143, 7
  %v145 = vsub.s32 0, %v144
  %v146 = vrot.slane %v141, %v145
  %v156 = vunpack.c.l.b16 %v21
  %v157 = vunpack.c.h.b16 %v21
  %v158 = vunpack.c.l.b16 %v22
  %v159 = vunpack.c.h.b16 %v22
  %v160 = vunpack.c.l.b16 %v23
  %v161 = vunpack.c.h.b16 %v23
  %v162 = vunpack.c.l.b16 %v24
  %v163 = vunpack.c.l.b16 %v25
  %v164 = vunpack.c.h.b16 %v25
  %v165 = vunpack.c.l.b16 %v26
  %v166 = vunpack.c.h.b16 %v26
  %v167 = vunpack.c.l.b16 %v27
  %v168 = vunpack.c.h.b16 %v27
  %v169 = vunpack.c.l.b16 %v28
  %v170 = vpack.c.b16 %v163, %v156
  %v171 = vpack.c.b16 %v164, %v157
  %v172 = vpack.c.b16 %v165, %v158
  %v173 = vpack.c.b16 %v166, %v159
  %v174 = vpack.c.b16 %v167, %v160
  %v175 = vpack.c.b16 %v168, %v161
  %v176 = vpack.c.b16 %v169, %v162
  %v296 = vunpack.c.l.b16 %v29
  %v297 = vunpack.c.l.b16 %v30
  %v298 = vunpack.c.l.b16 %v31
  %v299 = vunpack.c.l.b16 %v32
  %v300 = vunpack.c.l.b16 %v33
  %v301 = vunpack.c.l.b16 %v34
  %v302 = vunpack.c.l.b16 %v35
  %v303 = vunpack.c.l.b16 %v36
  %v304 = vunpack.c.l.b16 %v37
  %v305 = vunpack.c.l.b16 %v38
  %v306 = vunpack.c.l.b16 %v39
  %v307 = vunpack.c.l.b16 %v40
  %v308 = vunpack.c.l.b16 %v41
  %v309 = vunpack.c.l.b16 %v42
  %v310 = vunpack.c.l.b16 %v43
  %v311 = vunpack.c.l.b16 %v44
  %v312 = vunpack.c.l.b16 %v45
  %v313 = vunpack.c.l.b16 %v46
  %v314 = vunpack.c.l.b16 %v47
  %v315 = vunpack.c.l.b16 %v48
  %v316 = vunpack.c.l.b16 %v49
  %v317 = vunpack.c.l.b16 %v50
  %v318 = vunpack.c.l.b16 %v51
  %v319 = vunpack.c.l.b16 %v52
  %v320 = vunpack.c.l.b16 %v53
  %v321 = vunpack.c.l.b16 %v54
  %v322 = vunpack.c.l.b16 %v55
  %v323 = vunpack.c.l.b16 %v56
  %v324 = vunpack.c.l.b16 %v57
  %v325 = vunpack.c.l.b16 %v58
  %v326 = vunpack.c.l.b16 %v59
  %v327 = vunpack.c.l.b16 %v60
  %v328 = vunpack.c.l.b16 %v61
  %v329 = vunpack.c.l.b16 %v62
  %v330 = vunpack.c.l.b16 %v63
  %v331 = vunpack.c.l.b16 %v64
  %v332 = vunpack.c.l.b16 %v65
  %v333 = vunpack.c.l.b16 %v66
  %v334 = vunpack.c.l.b16 %v67
  %v335 = vunpack.c.l.b16 %v68
  %v336 = vunpack.c.l.b16 %v69
  %v337 = vunpack.c.l.b16 %v70
  %v338 = vunpack.c.l.b16 %v71
  %v339 = vunpack.c.l.b16 %v72
  %v340 = vunpack.c.l.b16 %v73
  %v341 = vunpack.c.l.b16 %v74
  %v342 = vunpack.c.l.b16 %v75
  %v343 = vunpack.c.l.b16 %v76
  %v344 = vunpack.c.l.b16 %v77
  %v345 = vunpack.c.l.b16 %v78
  %v346 = vunpack.c.l.b16 %v79
  %v347 = vunpack.c.l.b16 %v80
  %v348 = vunpack.c.l.b16 %v81
  %v349 = vunpack.c.l.b16 %v82
  %v350 = vunpack.c.l.b16 %v83
  %v351 = vunpack.c.l.b16 %v84
  %v352 = vunpack.c.l.b16 %v85
  %v353 = vunpack.c.l.b16 %v86
  %v354 = vunpack.c.l.b16 %v87
  %v355 = vunpack.c.l.b16 %v88
  %v356 = vunpack.c.l.b16 %v89
  %v357 = vunpack.c.l.b16 %v90
  %v358 = vunpack.c.l.b16 %v91
  %v359 = vunpack.c.l.b16 %v92
  %v360 = vunpack.c.l.b16 %v93
  %v361 = vunpack.c.l.b16 %v94
  %v362 = vunpack.c.l.b16 %v95
  %v363 = vunpack.c.l.b16 %v96
  %v364 = vunpack.c.l.b16 %v97
  %v365 = vunpack.c.l.b16 %v98
  %v366 = vunpack.c.l.b16 %v99
  %v367 = vunpack.c.l.b16 %v100
  %v368 = vunpack.c.l.b16 %v101
  %v369 = vunpack.c.l.b16 %v102
  %v370 = vunpack.c.l.b16 %v103
  %v371 = vunpack.c.l.b16 %v104
  %v372 = vunpack.c.l.b16 %v105
  %v373 = vunpack.c.l.b16 %v106
  %v374 = vunpack.c.l.b16 %v107
  %v375 = vunpack.c.l.b16 %v108
  %v376 = vunpack.c.l.b16 %v109
  %v377 = vunpack.c.l.b16 %v110
  %v378 = vunpack.c.l.b16 %v111
  %v379 = vunpack.c.l.b16 %v112
  %v380 = vunpack.c.l.b16 %v113
  %v381 = vunpack.c.l.b16 %v114
  %v382 = vunpack.c.l.b16 %v115
  %v383 = vunpack.c.l.b16 %v116
  %v384 = vunpack.c.l.b16 %v117
  %v385 = vunpack.c.l.b16 %v118
  %v386 = vunpack.c.l.b16 %v119
  %v387 = vunpack.c.l.b16 %v120
  %v388 = vunpack.c.l.b16 %v121
  %v389 = vunpack.c.l.b16 %v122
  %v390 = vunpack.c.l.b16 %v123
  %v391 = vunpack.c.l.b16 %v124
  %v392 = vunpack.c.l.b16 %v125
  %v393 = vunpack.c.l.b16 %v126
  %v394 = vunpack.c.l.b16 %v127
  %v395 = vunpack.c.l.b16 %v128
  %v396 = vunpack.c.l.b16 %v129
  %v397 = vunpack.c.l.b16 %v130
  %v398 = vunpack.c.l.b16 %v131
  %v399 = vunpack.c.l.b16 %v132
  %v400 = vunpack.c.l.b16 %v133
  %v401 = vunpack.c.l.b16 %v134
  %v402 = vunpack.c.l.b16 %v135
  %v403 = vunpack.c.l.b16 %v136
  %v404 = vunpack.c.l.b16 %v137
  %v405 = vunpack.c.l.b16 %v138
  %v406 = vunpack.c.l.b16 %v139
  %v407 = vunpack.c.l.b16 %v140
  %v408 = vpack.c.b16 %v297, %v296
  %v409 = vpack.c.b16 %v299, %v298
  %v410 = vpack.c.b16 %v301, %v300
  %v411 = vpack.c.b16 %v303, %v302
  %v412 = vpack.c.b16 %v305, %v304
  %v413 = vpack.c.b16 %v307, %v306
  %v414 = vpack.c.b16 %v309, %v308
  %v415 = vpack.c.b16 %v311, %v310
  %v416 = vpack.c.b16 %v313, %v312
  %v417 = vpack.c.b16 %v315, %v314
  %v418 = vpack.c.b16 %v317, %v316
  %v419 = vpack.c.b16 %v319, %v318
  %v420 = vpack.c.b16 %v321, %v320
  %v421 = vpack.c.b16 %v323, %v322
  %v422 = vpack.c.b16 %v325, %v324
  %v423 = vpack.c.b16 %v327, %v326
  %v424 = vpack.c.b16 %v329, %v328
  %v425 = vpack.c.b16 %v331, %v330
  %v426 = vpack.c.b16 %v333, %v332
  %v427 = vpack.c.b16 %v335, %v334
  %v428 = vpack.c.b16 %v337, %v336
  %v429 = vpack.c.b16 %v339, %v338
  %v430 = vpack.c.b16 %v341, %v340
  %v431 = vpack.c.b16 %v343, %v342
  %v432 = vpack.c.b16 %v345, %v344
  %v433 = vpack.c.b16 %v347, %v346
  %v434 = vpack.c.b16 %v349, %v348
  %v435 = vpack.c.b16 %v351, %v350
  %v436 = vpack.c.b16 %v353, %v352
  %v437 = vpack.c.b16 %v355, %v354
  %v438 = vpack.c.b16 %v357, %v356
  %v439 = vpack.c.b16 %v359, %v358
  %v440 = vpack.c.b16 %v361, %v360
  %v441 = vpack.c.b16 %v363, %v362
  %v442 = vpack.c.b16 %v365, %v364
  %v443 = vpack.c.b16 %v367, %v366
  %v444 = vpack.c.b16 %v369, %v368
  %v445 = vpack.c.b16 %v371, %v370
  %v446 = vpack.c.b16 %v373, %v372
  %v447 = vpack.c.b16 %v375, %v374
  %v448 = vpack.c.b16 %v377, %v376
  %v449 = vpack.c.b16 %v379, %v378
  %v450 = vpack.c.b16 %v381, %v380
  %v451 = vpack.c.b16 %v383, %v382
  %v452 = vpack.c.b16 %v385, %v384
  %v453 = vpack.c.b16 %v387, %v386
  %v454 = vpack.c.b16 %v389, %v388
  %v455 = vpack.c.b16 %v391, %v390
  %v456 = vpack.c.b16 %v393, %v392
  %v457 = vpack.c.b16 %v395, %v394
  %v458 = vpack.c.b16 %v397, %v396
  %v459 = vpack.c.b16 %v399, %v398
  %v460 = vpack.c.b16 %v401, %v400
  %v461 = vpack.c.b16 %v403, %v402
  %v462 = vpack.c.b16 %v405, %v404
  %v463 = vpack.c.b16 %v407, %v406
  %520 = vmatprep.subr.bf16.mxu0 0
  %521 = vmatpush1.bf16.msra.mxu0 %v415
  %522 = vmatprep.subr.bf16.mxu0 0
  %523 = vmatpush1.bf16.msra.mxu0 %v414
  %524 = vmatprep.subr.bf16.mxu0 0
  %525 = vmatpush1.bf16.msra.mxu0 %v413
  %526 = vmatprep.subr.bf16.mxu0 0
  %527 = vmatpush1.bf16.msra.mxu0 %v412
  %528 = vmatprep.subr.bf16.mxu0 0
  %529 = vmatpush1.bf16.msra.mxu0 %v411
  %530 = vmatprep.subr.bf16.mxu0 0
  %531 = vmatpush1.bf16.msra.mxu0 %v410
  %532 = vmatprep.subr.bf16.mxu0 0
  %533 = vmatpush1.bf16.msra.mxu0 %v409
  %534 = vmatprep.subr.bf16.mxu0 0
  %535 = vmatpush1.bf16.msra.mxu0 %v408
  %536 = vmatprep.subr.bf16.mxu0 0
  %537 = vmatpush2.bf16.msra.mxu0 %v423
  %538 = vmatprep.subr.bf16.mxu0 0
  %539 = vmatpush2.bf16.msra.mxu0 %v422
  %540 = vmatprep.subr.bf16.mxu0 0
  %541 = vmatpush2.bf16.msra.mxu0 %v421
  %542 = vmatprep.subr.bf16.mxu0 0
  %543 = vmatpush2.bf16.msra.mxu0 %v420
  %544 = vmatprep.subr.bf16.mxu0 0
  %545 = vmatpush2.bf16.msra.mxu0 %v419
  %546 = vmatprep.subr.bf16.mxu0 0
  %547 = vmatpush2.bf16.msra.mxu0 %v418
  %548 = vmatprep.subr.bf16.mxu0 0
  %549 = vmatpush2.bf16.msra.mxu0 %v417
  %550 = vmatprep.subr.bf16.mxu0 0
  %551 = vmatpush2.bf16.msra.mxu0 %v416
  %552 = vmatprep.mubr.bf16.mxu0 %v171
  %553 = vmatmul.mubr.bf16.gmra.mxu0 %v170
  %v554 = vpop.f32.mrf.mxu0
  %v555 = vadd.f32 %v146, %v554
  %v556 = vpop.f32.mrf.mxu0
  %v557 = vpop.f32.mrf.mxu0
  %v558 = vadd.f32 %v146, %v557
  %v559 = vpop.f32.mrf.mxu0
  %560 = vdwg.mxu0
  %561 = vmatprep.subr.bf16.mxu0 0
  %562 = vmatpush1.bf16.msra.mxu0 %v431
  %563 = vmatprep.subr.bf16.mxu0 0
  %564 = vmatpush1.bf16.msra.mxu0 %v430
  %565 = vmatprep.subr.bf16.mxu0 0
  %566 = vmatpush1.bf16.msra.mxu0 %v429
  %567 = vmatprep.subr.bf16.mxu0 0
  %568 = vmatpush1.bf16.msra.mxu0 %v428
  %569 = vmatprep.subr.bf16.mxu0 0
  %570 = vmatpush1.bf16.msra.mxu0 %v427
  %571 = vmatprep.subr.bf16.mxu0 0
  %572 = vmatpush1.bf16.msra.mxu0 %v426
  %573 = vmatprep.subr.bf16.mxu0 0
  %574 = vmatpush1.bf16.msra.mxu0 %v425
  %575 = vmatprep.subr.bf16.mxu0 0
  %576 = vmatpush1.bf16.msra.mxu0 %v424
  %577 = vmatprep.subr.bf16.mxu0 0
  %578 = vmatpush2.bf16.msra.mxu0 %v439
  %579 = vmatprep.subr.bf16.mxu0 0
  %580 = vmatpush2.bf16.msra.mxu0 %v438
  %581 = vmatprep.subr.bf16.mxu0 0
  %582 = vmatpush2.bf16.msra.mxu0 %v437
  %583 = vmatprep.subr.bf16.mxu0 0
  %584 = vmatpush2.bf16.msra.mxu0 %v436
  %585 = vmatprep.subr.bf16.mxu0 0
  %586 = vmatpush2.bf16.msra.mxu0 %v435
  %587 = vmatprep.subr.bf16.mxu0 0
  %588 = vmatpush2.bf16.msra.mxu0 %v434
  %589 = vmatprep.subr.bf16.mxu0 0
  %590 = vmatpush2.bf16.msra.mxu0 %v433
  %591 = vmatprep.subr.bf16.mxu0 0
  %592 = vmatpush2.bf16.msra.mxu0 %v432
  %593 = vmatprep.mubr.bf16.mxu0 %v173
  %594 = vmatmul.mubr.bf16.gmra.mxu0 %v172
  %v595 = vpop.f32.mrf.mxu0
  %v596 = vadd.f32 %v555, %v595
  %v597 = vpop.f32.mrf.mxu0
  %v598 = vpop.f32.mrf.mxu0
  %v599 = vadd.f32 %v558, %v598
  %v600 = vpop.f32.mrf.mxu0
  %601 = vdwg.mxu0
  %602 = vmatprep.subr.bf16.mxu0 0
  %603 = vmatpush1.bf16.msra.mxu0 %v447
  %604 = vmatprep.subr.bf16.mxu0 0
  %605 = vmatpush1.bf16.msra.mxu0 %v446
  %606 = vmatprep.subr.bf16.mxu0 0
  %607 = vmatpush1.bf16.msra.mxu0 %v445
  %608 = vmatprep.subr.bf16.mxu0 0
  %609 = vmatpush1.bf16.msra.mxu0 %v444
  %610 = vmatprep.subr.bf16.mxu0 0
  %611 = vmatpush1.bf16.msra.mxu0 %v443
  %612 = vmatprep.subr.bf16.mxu0 0
  %613 = vmatpush1.bf16.msra.mxu0 %v442
  %614 = vmatprep.subr.bf16.mxu0 0
  %615 = vmatpush1.bf16.msra.mxu0 %v441
  %616 = vmatprep.subr.bf16.mxu0 0
  %617 = vmatpush1.bf16.msra.mxu0 %v440
  %618 = vmatprep.subr.bf16.mxu0 0
  %619 = vmatpush2.bf16.msra.mxu0 %v455
  %620 = vmatprep.subr.bf16.mxu0 0
  %621 = vmatpush2.bf16.msra.mxu0 %v454
  %622 = vmatprep.subr.bf16.mxu0 0
  %623 = vmatpush2.bf16.msra.mxu0 %v453
  %624 = vmatprep.subr.bf16.mxu0 0
  %625 = vmatpush2.bf16.msra.mxu0 %v452
  %626 = vmatprep.subr.bf16.mxu0 0
  %627 = vmatpush2.bf16.msra.mxu0 %v451
  %628 = vmatprep.subr.bf16.mxu0 0
  %629 = vmatpush2.bf16.msra.mxu0 %v450
  %630 = vmatprep.subr.bf16.mxu0 0
  %631 = vmatpush2.bf16.msra.mxu0 %v449
  %632 = vmatprep.subr.bf16.mxu0 0
  %633 = vmatpush2.bf16.msra.mxu0 %v448
  %634 = vmatprep.mubr.bf16.mxu0 %v175
  %635 = vmatmul.mubr.bf16.gmra.mxu0 %v174
  %v636 = vpop.f32.mrf.mxu0
  %v637 = vadd.f32 %v596, %v636
  %v638 = vpop.f32.mrf.mxu0
  %v639 = vpop.f32.mrf.mxu0
  %v640 = vadd.f32 %v599, %v639
  %v641 = vpop.f32.mrf.mxu0
  %642 = vdwg.mxu0
  %643 = vmatprep.subr.bf16.mxu0 0
  %644 = vmatpush1.bf16.msra.mxu0 %v463
  %645 = vmatprep.subr.bf16.mxu0 0
  %646 = vmatpush1.bf16.msra.mxu0 %v462
  %647 = vmatprep.subr.bf16.mxu0 0
  %648 = vmatpush1.bf16.msra.mxu0 %v461
  %649 = vmatprep.subr.bf16.mxu0 0
  %650 = vmatpush1.bf16.msra.mxu0 %v460
  %651 = vmatprep.subr.bf16.mxu0 0
  %652 = vmatpush1.bf16.msra.mxu0 %v459
  %653 = vmatprep.subr.bf16.mxu0 0
  %654 = vmatpush1.bf16.msra.mxu0 %v458
  %655 = vmatprep.subr.bf16.mxu0 0
  %656 = vmatpush1.bf16.msra.mxu0 %v457
  %657 = vmatprep.subr.bf16.mxu0 0
  %658 = vmatpush1.bf16.msra.mxu0 %v456
  %659 = vmatprep.subr.bf16.mxu0 0
  %660 = vmatpush2.bf16.msra.mxu0 0
  %661 = vmatprep.subr.bf16.mxu0 0
  %662 = vmatpush2.bf16.msra.mxu0 0
  %663 = vmatprep.subr.bf16.mxu0 0
  %664 = vmatpush2.bf16.msra.mxu0 0
  %665 = vmatprep.subr.bf16.mxu0 0
  %666 = vmatpush2.bf16.msra.mxu0 0
  %667 = vmatprep.subr.bf16.mxu0 0
  %668 = vmatpush2.bf16.msra.mxu0 0
  %669 = vmatprep.subr.bf16.mxu0 0
  %670 = vmatpush2.bf16.msra.mxu0 0
  %671 = vmatprep.subr.bf16.mxu0 0
  %672 = vmatpush2.bf16.msra.mxu0 0
  %673 = vmatprep.subr.bf16.mxu0 0
  %674 = vmatpush2.bf16.msra.mxu0 0
  %675 = vmatprep.mubr.bf16.mxu0 0
  %676 = vmatmul.mubr.bf16.gmra.mxu0 %v176
  %v677 = vpop.f32.mrf.mxu0
  %v678 = vadd.f32 %v637, %v677
  %v679 = vpop.f32.mrf.mxu0
  %v680 = vpop.f32.mrf.mxu0
  %v681 = vadd.f32 %v640, %v680
  %v682 = vpop.f32.mrf.mxu0
  %683 = vdwg.mxu0
  %v684 = vmax.f32 %v678, 0.0
  %v685 = vmax.f32 %v681, 0.0
  %v686 = vpack.c.bf16 %v685, %v684
  %v687 = vld [vmem:[%s3] sm:$0xf]
  %v688 = vld [vmem:[%s3 + $0x4] sm:$0xf]
  %v689 = vld [vmem:[%s3 + $0x8] sm:$0xf]
  %v690 = vld [vmem:[%s3 + $0xc] sm:$0xf]
  %v691 = vld [vmem:[%s3 + $0x10] sm:$0xf]
  %v692 = vld [vmem:[%s3 + $0x14] sm:$0xf]
  %v693 = vld [vmem:[%s3 + $0x18] sm:$0xf]
  %v694 = vld [vmem:[%s3 + $0x1c] sm:$0xf]
  %v695 = vld [vmem:[%s3 + $0x20] sm:$0xf]
  %v696 = vld [vmem:[%s3 + $0x24] sm:$0xf]
  %v697 = vld [vmem:[%s3 + $0x28] sm:$0xf]
  %v698 = vld [vmem:[%s3 + $0x2c] sm:$0xf]
  %v699 = vld [vmem:[%s3 + $0x30] sm:$0xf]
  %v700 = vld [vmem:[%s3 + $0x34] sm:$0xf]
  %v701 = vld [vmem:[%s3 + $0x38] sm:$0xf]
  %v702 = vld [vmem:[%s3 + $0x3c] sm:$0xf]
  %v703 = vld [vmem:[%s4] sm:$0x1]
  %v705 = vlaneseq
  %v706 = vshrl.u32 %v705, 7
  %v707 = vsub.s32 0, %v706
  %v708 = vrot.slane %v703, %v707
  %v726 = vunpack.c.l.b16 %v687
  %v727 = vunpack.c.l.b16 %v688
  %v728 = vunpack.c.l.b16 %v689
  %v729 = vunpack.c.l.b16 %v690
  %v730 = vunpack.c.l.b16 %v691
  %v731 = vunpack.c.l.b16 %v692
  %v732 = vunpack.c.l.b16 %v693
  %v733 = vunpack.c.l.b16 %v694
  %v734 = vunpack.c.l.b16 %v695
  %v735 = vunpack.c.l.b16 %v696
  %v736 = vunpack.c.l.b16 %v697
  %v737 = vunpack.c.l.b16 %v698
  %v738 = vunpack.c.l.b16 %v699
  %v739 = vunpack.c.l.b16 %v700
  %v740 = vunpack.c.l.b16 %v701
  %v741 = vunpack.c.l.b16 %v702
  %v742 = vpack.c.b16 %v727, %v726
  %v743 = vpack.c.b16 %v729, %v728
  %v744 = vpack.c.b16 %v731, %v730
  %v745 = vpack.c.b16 %v733, %v732
  %v746 = vpack.c.b16 %v735, %v734
  %v747 = vpack.c.b16 %v737, %v736
  %v748 = vpack.c.b16 %v739, %v738
  %v749 = vpack.c.b16 %v741, %v740
  %758 = vmatprep.subr.bf16.mxu0 0
  %759 = vmatpush1.bf16.msra.mxu0 %v749
  %760 = vmatprep.subr.bf16.mxu0 0
  %761 = vmatpush1.bf16.msra.mxu0 %v748
  %762 = vmatprep.subr.bf16.mxu0 0
  %763 = vmatpush1.bf16.msra.mxu0 %v747
  %764 = vmatprep.subr.bf16.mxu0 0
  %765 = vmatpush1.bf16.msra.mxu0 %v746
  %766 = vmatprep.subr.bf16.mxu0 0
  %767 = vmatpush1.bf16.msra.mxu0 %v745
  %768 = vmatprep.subr.bf16.mxu0 0
  %769 = vmatpush1.bf16.msra.mxu0 %v744
  %770 = vmatprep.subr.bf16.mxu0 0
  %771 = vmatpush1.bf16.msra.mxu0 %v743
  %772 = vmatprep.subr.bf16.mxu0 0
  %773 = vmatpush1.bf16.msra.mxu0 %v742
  %774 = vmatprep.subr.bf16.mxu0 0
  %775 = vmatpush2.bf16.msra.mxu0 0
  %776 = vmatprep.subr.bf16.mxu0 0
  %777 = vmatpush2.bf16.msra.mxu0 0
  %778 = vmatprep.subr.bf16.mxu0 0
  %779 = vmatpush2.bf16.msra.mxu0 0
  %780 = vmatprep.subr.bf16.mxu0 0
  %781 = vmatpush2.bf16.msra.mxu0 0
  %782 = vmatprep.subr.bf16.mxu0 0
  %783 = vmatpush2.bf16.msra.mxu0 0
  %784 = vmatprep.subr.bf16.mxu0 0
  %785 = vmatpush2.bf16.msra.mxu0 0
  %786 = vmatprep.subr.bf16.mxu0 0
  %787 = vmatpush2.bf16.msra.mxu0 0
  %788 = vmatprep.subr.bf16.mxu0 0
  %789 = vmatpush2.bf16.msra.mxu0 0
  %790 = vmatprep.mubr.bf16.mxu0 0
  %791 = vmatmul.mubr.bf16.gmra.mxu0 %v686
  %v792 = vpop.f32.mrf.mxu0
  %v793 = vadd.f32 %v708, %v792
  %v794 = vpop.f32.mrf.mxu0
  %v795 = vpop.f32.mrf.mxu0
  %v796 = vadd.f32 %v708, %v795
  %v797 = vpop.f32.mrf.mxu0
  %798 = vdwg.mxu0
  %799 = vst [vmem:[%s5] sm:$0xff] %v793
  %800 = vst [vmem:[%s5 + $0x8] sm:$0xff] %v796
  // Predicated region
  $region22: #{dqn_forward.5} parent=0 // pred_check
    _
  $region23: #{dqn_forward.5} parent=0 // pred_check_branch
    %802 = sbr.rel (0) target = $region25
  $region24: #{dqn_forward.5} parent=0 // pred_region
    _
  $region25: #{dqn_forward.5} parent=0 // pred_fallthru
    _
  // Predicated region
  $region26: #{dqn_forward.5} parent=0 // pred_check
    _
  $region27: #{dqn_forward.5} parent=0 // pred_check_branch
    %804 = sbr.rel (0) target = $region29
  $region28: #{dqn_forward.5} parent=0 // pred_region
    _
  $region29: #{dqn_forward.5} parent=0 // pred_fallthru
    _

</llo_original>
